<compile_context>
chip_gen: v7x
topology: tpu7x:2x2x1
jax: 0.10.0
libtpu: 0.0.40
codegen_flags: <defaults>
</compile_context>

<pallas_src>
import functools

import jax
import jax.numpy as jnp
from jax.experimental import pallas as pl
from jax.experimental.pallas import tpu as pltpu

# ----------------------- model hyper-parameters -----------------------------
INPUT_SIZE = 1
OUTPUT_SIZE = 1
HIDDEN_DIM = 32
N_LAYERS = 2
BATCH = 2
SEQ = 8

OUT_PAD = 128  # lane-dense padded FC output width


# ------------------------- shared weight layout ------------------------------
def _round_up(x, m):
    return (x + m - 1) // m * m


def _weight_layout(n_layers, input_size, hidden_dim):
    """Row layout of the single flat (rows, cols) f32 weight buffer.

    Returns (layout: name -> (row, nrows, ncols), total_rows, cols).
    Used by BOTH the wrapper packing and the kernel unpacking so the static
    offsets can never go out of sync.  Every section starts on a multiple of
    8 rows (sublane-aligned views).
    """
    h = hidden_dim
    cols = max(OUT_PAD, 2 * h)
    layout = {}
    row = 0

    def add(name, nrows, ncols):
        nonlocal row
        layout[name] = (row, nrows, ncols)
        row += _round_up(nrows, 8)

    add("w_ih0", input_size, h)          # layer-0 input weights^T  (in, H)
    add("b0", 1, h)                      # b_ih0 + b_hh0            (1, H)
    for l in range(n_layers - 1):
        add(f"wpack{l}", h, 2 * h)       # [w_hh_l^T | w_ih_{l+1}^T] (H, 2H)
        add(f"b{l + 1}", 1, h)           # b_ih + b_hh of layer l+1  (1, H)
    add("w_hh_last", h, h)               # last layer's w_hh^T       (H, H)
    add("fcw", h, OUT_PAD)               # fc weight^T, zero-padded  (H, 128)
    add("fcb", 1, OUT_PAD)               # fc bias, zero-padded      (1, 128)
    return layout, row, cols


# ------------------------------- kernel -------------------------------------
def _rnn_fc_kernel(n_layers, batch, seq, input_size, hidden_dim, layout,
                   x_ref, h0_ref, w_ref, out_ref, hid_ref, r_sc):
    h = hidden_dim

    def wslice(name):
        r, nrows, ncols = layout[name]
        return w_ref[r:r + nrows, :ncols]

    # --- hoisted weight/bias loads: one flat buffer, static aligned views ---
    w_ih0 = wslice("w_ih0")                                       # (in, H)
    b0 = wslice("b0")                                             # (1, H)
    w_pack = [wslice(f"wpack{l}") for l in range(n_layers - 1)]   # (H, 2H)
    biases = [wslice(f"b{l + 1}") for l in range(n_layers - 1)]   # (1, H)
    w_hh_last = wslice("w_hh_last")                               # (H, H)
    fcw = wslice("fcw")                                           # (H, 128)
    fcb = wslice("fcb")                                           # (1, 128)

    # --- layer-0 input projection for ALL timesteps (off the serial chain) --
    x = x_ref[...]                                     # (seq*batch, in), time-major
    if input_size == 1:
        # K=1 contraction -> VPU broadcast multiply; keeps the MXU pipe free.
        xproj = x * w_ih0 + b0
    else:
        xproj = jnp.dot(x, w_ih0, preferred_element_type=jnp.float32) + b0

    # --- hidden-state carry + off-chain recurrent terms ---------------------
    hc = [h0_ref[l] for l in range(n_layers)]
    # rec[0]    = h0_{t-1} @ w_hh0^T                 (b0 already in xproj)
    # rec[l>=1] = h_l_{t-1} @ w_hh_l^T + b_l         (bias folded off-chain)
    rec = []
    for l in range(n_layers - 1):
        r0 = jnp.dot(hc[l], w_pack[l],
                     preferred_element_type=jnp.float32)[:, :h]
        rec.append(r0 if l == 0 else r0 + biases[l - 1])
    rec_last = jnp.dot(hc[n_layers - 1], w_hh_last,
                       preferred_element_type=jnp.float32)
    if n_layers > 1:
        rec_last = rec_last + biases[n_layers - 2]
    rec.append(rec_last)

    # --- serial recurrence: statically unrolled so all steps live in one ----
    # --- basic block and the per-layer chains overlap as a wavefront --------
    for t in range(seq):
        last_step = (t + 1 == seq)

        # layer 0: the only on-chain work is one add + tanh (+ packed matmul)
        hc[0] = jnp.tanh(xproj[t * batch:(t + 1) * batch, :] + rec[0])
        if n_layers > 1:
            # one MXU round trip -> layer-0 recurrent term for step t+1 and
            # layer-1's input term for step t.
            packed = jnp.dot(hc[0], w_pack[0],
                             preferred_element_type=jnp.float32)
            rec[0] = packed[:, :h]
            ih = packed[:, h:]
        elif not last_step:
            rec[0] = jnp.dot(hc[0], w_hh_last,
                             preferred_element_type=jnp.float32)

        # layers >= 1: hh-term (+bias) was computed off-chain last step
        for l in range(1, n_layers):
            hc[l] = jnp.tanh(ih + rec[l])
            if l < n_layers - 1:
                packed = jnp.dot(hc[l], w_pack[l],
                                 preferred_element_type=jnp.float32)
                rec[l] = packed[:, :h] + biases[l - 1]
                ih = packed[:, h:]
            elif not last_step:
                rec[l] = (jnp.dot(hc[l], w_hh_last,
                                  preferred_element_type=jnp.float32)
                          + biases[l - 1])

        # time-major per-step store of the last layer's output
        r_sc[t * batch:(t + 1) * batch, :] = hc[n_layers - 1]

    # final hidden state (n_layers, batch, H); output buffer aliases h0
    for l in range(n_layers):
        hid_ref[l] = hc[l]

    # --- final Linear: one (seq*batch, H) @ (H, 128) lane-dense matmul ------
    out_ref[...] = jnp.dot(r_sc[...], fcw,
                           preferred_element_type=jnp.float32) + fcb


# ------------------------------- wrapper -------------------------------------
@functools.partial(jax.jit, donate_argnums=(1,))
def rnn_forward(x, h0, layer_params, fc_w, fc_b):
    """layer_params: list of (w_ih(H,in), w_hh(H,H), b_ih(1,H), b_hh(1,H))."""
    batch, seq, input_size = x.shape
    n_layers = len(layer_params)
    hidden_dim = fc_w.shape[1]
    output_size = fc_w.shape[0]

    layout, total_rows, cols = _weight_layout(n_layers, input_size, hidden_dim)

    # time-major flattened x: row t*batch + b holds x[b, t, :]
    x_tm = jnp.transpose(x, (1, 0, 2)).reshape(seq * batch, input_size)

    # ---- one flat f32 weight buffer (single DMA), packed once in XLA -------
    def put(buf, name, val):
        r, nrows, ncols = layout[name]
        return buf.at[r:r + nrows, :ncols].set(val.astype(jnp.float32))

    wbuf = jnp.zeros((total_rows, cols), jnp.float32)
    w_ih0, w_hh0, b_ih0, b_hh0 = layer_params[0]
    wbuf = put(wbuf, "w_ih0", w_ih0.T)                       # (in, H)
    wbuf = put(wbuf, "b0", (b_ih0 + b_hh0).reshape(1, -1))   # (1, H)
    for l in range(n_layers - 1):
        w_hh_l = layer_params[l][1]
        w_ih_n, w_hh_n, b_ih_n, b_hh_n = layer_params[l + 1]
        wbuf = put(wbuf, f"wpack{l}",
                   jnp.concatenate([w_hh_l.T, w_ih_n.T], axis=1))  # (H, 2H)
        wbuf = put(wbuf, f"b{l + 1}", (b_ih_n + b_hh_n).reshape(1, -1))
    wbuf = put(wbuf, "w_hh_last", layer_params[n_layers - 1][1].T)
    # lane-dense padded FC: only the first `output_size` lanes are non-zero
    r_fcw, _, _ = layout["fcw"]
    wbuf = wbuf.at[r_fcw:r_fcw + hidden_dim, :output_size].set(
        fc_w.T.astype(jnp.float32))
    r_fcb, _, _ = layout["fcb"]
    wbuf = wbuf.at[r_fcb:r_fcb + 1, :output_size].set(
        fc_b.reshape(1, -1).astype(jnp.float32))

    kernel = functools.partial(_rnn_fc_kernel, n_layers, batch, seq,
                               input_size, hidden_dim, layout)

    vmem = pl.BlockSpec(memory_space=pltpu.MemorySpace.VMEM)
    out_shape = (
        jax.ShapeDtypeStruct((seq * batch, OUT_PAD), jnp.float32),
        jax.ShapeDtypeStruct((n_layers, batch, hidden_dim), jnp.float32),
    )
    out_tm, hidden = pl.pallas_call(
        kernel,
        out_shape=out_shape,
        in_specs=[vmem, vmem, vmem],
        out_specs=(vmem, vmem),
        scratch_shapes=[pltpu.VMEM((seq * batch, hidden_dim), jnp.float32)],
        input_output_aliases={1: 1},   # donated h0 buffer -> hidden output
    )(x_tm, h0, wbuf)

    # (seq*batch, OUT_PAD) time-major -> PyTorch's batch-major (b*seq+t) rows,
    # then slice the real output columns.  Pure XLA reshapes (free).
    out = (out_tm.reshape(seq, batch, OUT_PAD)
           .transpose(1, 0, 2)
           .reshape(batch * seq, OUT_PAD)[:, :output_size])
    return out, hidden


# ------------------------------ reference ------------------------------------
def rnn_forward_ref(x, h0, layer_params, fc_w, fc_b):
    batch, seq, _ = x.shape
    n_layers = len(layer_params)
    h = [h0[l] for l in range(n_layers)]
    outs = []
    for t in range(seq):
        inp = x[:, t, :]
        for l in range(n_layers):
            w_ih, w_hh, b_ih, b_hh = layer_params[l]
            h[l] = jnp.tanh(inp @ w_ih.T + h[l] @ w_hh.T + b_ih + b_hh)
            inp = h[l]
        outs.append(inp)
    r = jnp.stack(outs, axis=1).reshape(batch * seq, -1)
    return r @ fc_w.T + fc_b, jnp.stack(h, axis=0)


# --------------------------------- main ---------------------------------------
if __name__ == "__main__":
    key = jax.random.PRNGKey(0)

    def uniform(k, shape, bound):
        return jax.random.uniform(k, shape, jnp.float32, -bound, bound)

    bound = HIDDEN_DIM ** -0.5

    keys = jax.random.split(key, 4 * N_LAYERS + 4)
    ki = iter(range(len(keys)))

    layer_params = []
    for l in range(N_LAYERS):
        in_feat = INPUT_SIZE if l == 0 else HIDDEN_DIM
        w_ih = uniform(keys[next(ki)], (HIDDEN_DIM, in_feat), bound)
        w_hh = uniform(keys[next(ki)], (HIDDEN_DIM, HIDDEN_DIM), bound)
        b_ih = uniform(keys[next(ki)], (1, HIDDEN_DIM), bound)
        b_hh = uniform(keys[next(ki)], (1, HIDDEN_DIM), bound)
        layer_params.append((w_ih, w_hh, b_ih, b_hh))

    fc_w = uniform(keys[next(ki)], (OUTPUT_SIZE, HIDDEN_DIM), bound)
    fc_b = uniform(keys[next(ki)], (1, OUTPUT_SIZE), bound)

    x = jax.random.normal(keys[next(ki)], (BATCH, SEQ, INPUT_SIZE), jnp.float32)
    h0 = jax.random.normal(keys[next(ki)], (N_LAYERS, BATCH, HIDDEN_DIM),
                           jnp.float32)

    # Reference first: h0 is donated to the Pallas path below.
    out_ref, hidden_ref = rnn_forward_ref(x, h0, layer_params, fc_w, fc_b)

    out, hidden = rnn_forward(x, h0, layer_params, fc_w, fc_b)
    jax.block_until_ready((out, hidden))

    assert out.shape == (BATCH * SEQ, OUTPUT_SIZE)
    assert hidden.shape == (N_LAYERS, BATCH, HIDDEN_DIM)
    assert jnp.allclose(out, out_ref, rtol=1e-4, atol=1e-4)
    assert jnp.allclose(hidden, hidden_ref, rtol=1e-4, atol=1e-4)

    print("KERNEL_OK")
</pallas_src>

<mosaic_0001>
module attributes {stable_mosaic.version = 11 : i64} {
  func.func @_rnn_fc_kernel(%arg0: memref<16x1xf32, #tpu.memory_space<vmem>>, %arg1: memref<2x2x32xf32, #tpu.memory_space<vmem>>, %arg2: memref<128x128xf32, #tpu.memory_space<vmem>>, %arg3: memref<16x128xf32, #tpu.memory_space<vmem>>, %arg4: memref<2x2x32xf32, #tpu.memory_space<vmem>>, %arg5: memref<16x32xf32, #tpu.memory_space<vmem>>) attributes {dimension_semantics = [], scalar_prefetch = 0 : i64, scratch_operands = 1 : i64, tpu.core_type = #tpu.core_type<tc>} {
    %c0 = arith.constant 0 : index
    %c0_0 = arith.constant 0 : index
    %0 = vector.load %arg2[%c0, %c0_0] : memref<128x128xf32, #tpu.memory_space<vmem>>, vector<1x32xf32>
    %c8 = arith.constant 8 : index
    %c0_1 = arith.constant 0 : index
    %1 = vector.load %arg2[%c8, %c0_1] : memref<128x128xf32, #tpu.memory_space<vmem>>, vector<1x32xf32>
    %c16 = arith.constant 16 : index
    %c0_2 = arith.constant 0 : index
    %2 = vector.load %arg2[%c16, %c0_2] : memref<128x128xf32, #tpu.memory_space<vmem>>, vector<32x64xf32>
    %c48 = arith.constant 48 : index
    %c0_3 = arith.constant 0 : index
    %3 = vector.load %arg2[%c48, %c0_3] : memref<128x128xf32, #tpu.memory_space<vmem>>, vector<1x32xf32>
    %c56 = arith.constant 56 : index
    %c0_4 = arith.constant 0 : index
    %4 = vector.load %arg2[%c56, %c0_4] : memref<128x128xf32, #tpu.memory_space<vmem>>, vector<32x32xf32>
    %c88 = arith.constant 88 : index
    %c0_5 = arith.constant 0 : index
    %5 = vector.load %arg2[%c88, %c0_5] : memref<128x128xf32, #tpu.memory_space<vmem>>, vector<32x128xf32>
    %c120 = arith.constant 120 : index
    %c0_6 = arith.constant 0 : index
    %6 = vector.load %arg2[%c120, %c0_6] : memref<128x128xf32, #tpu.memory_space<vmem>>, vector<1x128xf32>
    %c0_7 = arith.constant 0 : index
    %c0_8 = arith.constant 0 : index
    %7 = vector.load %arg0[%c0_7, %c0_8] : memref<16x1xf32, #tpu.memory_space<vmem>>, vector<16x1xf32>
    %8 = vector.broadcast %7 : vector<16x1xf32> to vector<16x32xf32>
    %9 = vector.broadcast %0 : vector<1x32xf32> to vector<16x32xf32>
    %10 = arith.mulf %8, %9 : vector<16x32xf32>
    %11 = vector.broadcast %1 : vector<1x32xf32> to vector<16x32xf32>
    %12 = arith.addf %10, %11 : vector<16x32xf32>
    %c0_9 = arith.constant 0 : index
    %c0_10 = arith.constant 0 : index
    %c0_11 = arith.constant 0 : index
    %13 = vector.load %arg1[%c0_9, %c0_10, %c0_11] : memref<2x2x32xf32, #tpu.memory_space<vmem>>, vector<1x2x32xf32>
    %14 = vector.shape_cast %13 : vector<1x2x32xf32> to vector<2x32xf32>
    %c1 = arith.constant 1 : index
    %c0_12 = arith.constant 0 : index
    %c0_13 = arith.constant 0 : index
    %15 = vector.load %arg1[%c1, %c0_12, %c0_13] : memref<2x2x32xf32, #tpu.memory_space<vmem>>, vector<1x2x32xf32>
    %16 = vector.shape_cast %15 : vector<1x2x32xf32> to vector<2x32xf32>
    %cst = arith.constant dense<0.000000e+00> : vector<2x64xf32>
    %17 = tpu.matmul %14, %2, %cst {dimension_numbers = #tpu.dot_dimension_numbers<[1], [0], [0], [1], [0, 0, 1, 1], [], []>} : vector<2x32xf32>, vector<32x64xf32>, vector<2x64xf32> -> vector<2x64xf32>
    %18 = vector.extract_strided_slice %17 {offsets = [0, 0], sizes = [2, 32], strides = [1, 1]} : vector<2x64xf32> to vector<2x32xf32>
    %cst_14 = arith.constant dense<0.000000e+00> : vector<2x32xf32>
    %19 = tpu.matmul %16, %4, %cst_14 {dimension_numbers = #tpu.dot_dimension_numbers<[1], [0], [0], [1], [0, 0, 1, 1], [], []>} : vector<2x32xf32>, vector<32x32xf32>, vector<2x32xf32> -> vector<2x32xf32>
    %20 = vector.broadcast %3 : vector<1x32xf32> to vector<2x32xf32>
    %21 = arith.addf %19, %20 : vector<2x32xf32>
    %22 = vector.extract_strided_slice %12 {offsets = [0, 0], sizes = [2, 32], strides = [1, 1]} : vector<16x32xf32> to vector<2x32xf32>
    %23 = arith.addf %22, %18 : vector<2x32xf32>
    %24 = math.tanh %23 : vector<2x32xf32>
    %cst_15 = arith.constant dense<0.000000e+00> : vector<2x64xf32>
    %25 = tpu.matmul %24, %2, %cst_15 {dimension_numbers = #tpu.dot_dimension_numbers<[1], [0], [0], [1], [0, 0, 1, 1], [], []>} : vector<2x32xf32>, vector<32x64xf32>, vector<2x64xf32> -> vector<2x64xf32>
    %26 = vector.extract_strided_slice %25 {offsets = [0, 0], sizes = [2, 32], strides = [1, 1]} : vector<2x64xf32> to vector<2x32xf32>
    %27 = vector.extract_strided_slice %25 {offsets = [0, 32], sizes = [2, 32], strides = [1, 1]} : vector<2x64xf32> to vector<2x32xf32>
    %28 = arith.addf %27, %21 : vector<2x32xf32>
    %29 = math.tanh %28 : vector<2x32xf32>
    %cst_16 = arith.constant dense<0.000000e+00> : vector<2x32xf32>
    %30 = tpu.matmul %29, %4, %cst_16 {dimension_numbers = #tpu.dot_dimension_numbers<[1], [0], [0], [1], [0, 0, 1, 1], [], []>} : vector<2x32xf32>, vector<32x32xf32>, vector<2x32xf32> -> vector<2x32xf32>
    %31 = vector.broadcast %3 : vector<1x32xf32> to vector<2x32xf32>
    %32 = arith.addf %30, %31 : vector<2x32xf32>
    %c0_17 = arith.constant 0 : index
    %c0_18 = arith.constant 0 : index
    %33 = vector.load %arg5[%c0_17, %c0_18] : memref<16x32xf32, #tpu.memory_space<vmem>>, vector<2x32xf32>
    tpu.vector_store %arg5[%c0_17, %c0_18], %29 {strides = array<i32>} : memref<16x32xf32, #tpu.memory_space<vmem>>, vector<2x32xf32>,
    %34 = vector.extract_strided_slice %12 {offsets = [2, 0], sizes = [2, 32], strides = [1, 1]} : vector<16x32xf32> to vector<2x32xf32>
    %35 = arith.addf %34, %26 : vector<2x32xf32>
    %36 = math.tanh %35 : vector<2x32xf32>
    %cst_19 = arith.constant dense<0.000000e+00> : vector<2x64xf32>
    %37 = tpu.matmul %36, %2, %cst_19 {dimension_numbers = #tpu.dot_dimension_numbers<[1], [0], [0], [1], [0, 0, 1, 1], [], []>} : vector<2x32xf32>, vector<32x64xf32>, vector<2x64xf32> -> vector<2x64xf32>
    %38 = vector.extract_strided_slice %37 {offsets = [0, 0], sizes = [2, 32], strides = [1, 1]} : vector<2x64xf32> to vector<2x32xf32>
    %39 = vector.extract_strided_slice %37 {offsets = [0, 32], sizes = [2, 32], strides = [1, 1]} : vector<2x64xf32> to vector<2x32xf32>
    %40 = arith.addf %39, %32 : vector<2x32xf32>
    %41 = math.tanh %40 : vector<2x32xf32>
    %cst_20 = arith.constant dense<0.000000e+00> : vector<2x32xf32>
    %42 = tpu.matmul %41, %4, %cst_20 {dimension_numbers = #tpu.dot_dimension_numbers<[1], [0], [0], [1], [0, 0, 1, 1], [], []>} : vector<2x32xf32>, vector<32x32xf32>, vector<2x32xf32> -> vector<2x32xf32>
    %43 = vector.broadcast %3 : vector<1x32xf32> to vector<2x32xf32>
    %44 = arith.addf %42, %43 : vector<2x32xf32>
    %c2 = arith.constant 2 : index
    %c0_21 = arith.constant 0 : index
    %45 = vector.load %arg5[%c2, %c0_21] : memref<16x32xf32, #tpu.memory_space<vmem>>, vector<2x32xf32>
    tpu.vector_store %arg5[%c2, %c0_21], %41 {strides = array<i32>} : memref<16x32xf32, #tpu.memory_space<vmem>>, vector<2x32xf32>,
    %46 = vector.extract_strided_slice %12 {offsets = [4, 0], sizes = [2, 32], strides = [1, 1]} : vector<16x32xf32> to vector<2x32xf32>
    %47 = arith.addf %46, %38 : vector<2x32xf32>
    %48 = math.tanh %47 : vector<2x32xf32>
    %cst_22 = arith.constant dense<0.000000e+00> : vector<2x64xf32>
    %49 = tpu.matmul %48, %2, %cst_22 {dimension_numbers = #tpu.dot_dimension_numbers<[1], [0], [0], [1], [0, 0, 1, 1], [], []>} : vector<2x32xf32>, vector<32x64xf32>, vector<2x64xf32> -> vector<2x64xf32>
    %50 = vector.extract_strided_slice %49 {offsets = [0, 0], sizes = [2, 32], strides = [1, 1]} : vector<2x64xf32> to vector<2x32xf32>
    %51 = vector.extract_strided_slice %49 {offsets = [0, 32], sizes = [2, 32], strides = [1, 1]} : vector<2x64xf32> to vector<2x32xf32>
    %52 = arith.addf %51, %44 : vector<2x32xf32>
    %53 = math.tanh %52 : vector<2x32xf32>
    %cst_23 = arith.constant dense<0.000000e+00> : vector<2x32xf32>
    %54 = tpu.matmul %53, %4, %cst_23 {dimension_numbers = #tpu.dot_dimension_numbers<[1], [0], [0], [1], [0, 0, 1, 1], [], []>} : vector<2x32xf32>, vector<32x32xf32>, vector<2x32xf32> -> vector<2x32xf32>
    %55 = vector.broadcast %3 : vector<1x32xf32> to vector<2x32xf32>
    %56 = arith.addf %54, %55 : vector<2x32xf32>
    %c4 = arith.constant 4 : index
    %c0_24 = arith.constant 0 : index
    %57 = vector.load %arg5[%c4, %c0_24] : memref<16x32xf32, #tpu.memory_space<vmem>>, vector<2x32xf32>
    tpu.vector_store %arg5[%c4, %c0_24], %53 {strides = array<i32>} : memref<16x32xf32, #tpu.memory_space<vmem>>, vector<2x32xf32>,
    %58 = vector.extract_strided_slice %12 {offsets = [6, 0], sizes = [2, 32], strides = [1, 1]} : vector<16x32xf32> to vector<2x32xf32>
    %59 = arith.addf %58, %50 : vector<2x32xf32>
    %60 = math.tanh %59 : vector<2x32xf32>
    %cst_25 = arith.constant dense<0.000000e+00> : vector<2x64xf32>
    %61 = tpu.matmul %60, %2, %cst_25 {dimension_numbers = #tpu.dot_dimension_numbers<[1], [0], [0], [1], [0, 0, 1, 1], [], []>} : vector<2x32xf32>, vector<32x64xf32>, vector<2x64xf32> -> vector<2x64xf32>
    %62 = vector.extract_strided_slice %61 {offsets = [0, 0], sizes = [2, 32], strides = [1, 1]} : vector<2x64xf32> to vector<2x32xf32>
    %63 = vector.extract_strided_slice %61 {offsets = [0, 32], sizes = [2, 32], strides = [1, 1]} : vector<2x64xf32> to vector<2x32xf32>
    %64 = arith.addf %63, %56 : vector<2x32xf32>
    %65 = math.tanh %64 : vector<2x32xf32>
    %cst_26 = arith.constant dense<0.000000e+00> : vector<2x32xf32>
    %66 = tpu.matmul %65, %4, %cst_26 {dimension_numbers = #tpu.dot_dimension_numbers<[1], [0], [0], [1], [0, 0, 1, 1], [], []>} : vector<2x32xf32>, vector<32x32xf32>, vector<2x32xf32> -> vector<2x32xf32>
    %67 = vector.broadcast %3 : vector<1x32xf32> to vector<2x32xf32>
    %68 = arith.addf %66, %67 : vector<2x32xf32>
    %c6 = arith.constant 6 : index
    %c0_27 = arith.constant 0 : index
    %69 = vector.load %arg5[%c6, %c0_27] : memref<16x32xf32, #tpu.memory_space<vmem>>, vector<2x32xf32>
    tpu.vector_store %arg5[%c6, %c0_27], %65 {strides = array<i32>} : memref<16x32xf32, #tpu.memory_space<vmem>>, vector<2x32xf32>,
    %70 = vector.extract_strided_slice %12 {offsets = [8, 0], sizes = [2, 32], strides = [1, 1]} : vector<16x32xf32> to vector<2x32xf32>
    %71 = arith.addf %70, %62 : vector<2x32xf32>
    %72 = math.tanh %71 : vector<2x32xf32>
    %cst_28 = arith.constant dense<0.000000e+00> : vector<2x64xf32>
    %73 = tpu.matmul %72, %2, %cst_28 {dimension_numbers = #tpu.dot_dimension_numbers<[1], [0], [0], [1], [0, 0, 1, 1], [], []>} : vector<2x32xf32>, vector<32x64xf32>, vector<2x64xf32> -> vector<2x64xf32>
    %74 = vector.extract_strided_slice %73 {offsets = [0, 0], sizes = [2, 32], strides = [1, 1]} : vector<2x64xf32> to vector<2x32xf32>
    %75 = vector.extract_strided_slice %73 {offsets = [0, 32], sizes = [2, 32], strides = [1, 1]} : vector<2x64xf32> to vector<2x32xf32>
    %76 = arith.addf %75, %68 : vector<2x32xf32>
    %77 = math.tanh %76 : vector<2x32xf32>
    %cst_29 = arith.constant dense<0.000000e+00> : vector<2x32xf32>
    %78 = tpu.matmul %77, %4, %cst_29 {dimension_numbers = #tpu.dot_dimension_numbers<[1], [0], [0], [1], [0, 0, 1, 1], [], []>} : vector<2x32xf32>, vector<32x32xf32>, vector<2x32xf32> -> vector<2x32xf32>
    %79 = vector.broadcast %3 : vector<1x32xf32> to vector<2x32xf32>
    %80 = arith.addf %78, %79 : vector<2x32xf32>
    %c8_30 = arith.constant 8 : index
    %c0_31 = arith.constant 0 : index
    %81 = vector.load %arg5[%c8_30, %c0_31] : memref<16x32xf32, #tpu.memory_space<vmem>>, vector<2x32xf32>
    tpu.vector_store %arg5[%c8_30, %c0_31], %77 {strides = array<i32>} : memref<16x32xf32, #tpu.memory_space<vmem>>, vector<2x32xf32>,
    %82 = vector.extract_strided_slice %12 {offsets = [10, 0], sizes = [2, 32], strides = [1, 1]} : vector<16x32xf32> to vector<2x32xf32>
    %83 = arith.addf %82, %74 : vector<2x32xf32>
    %84 = math.tanh %83 : vector<2x32xf32>
    %cst_32 = arith.constant dense<0.000000e+00> : vector<2x64xf32>
    %85 = tpu.matmul %84, %2, %cst_32 {dimension_numbers = #tpu.dot_dimension_numbers<[1], [0], [0], [1], [0, 0, 1, 1], [], []>} : vector<2x32xf32>, vector<32x64xf32>, vector<2x64xf32> -> vector<2x64xf32>
    %86 = vector.extract_strided_slice %85 {offsets = [0, 0], sizes = [2, 32], strides = [1, 1]} : vector<2x64xf32> to vector<2x32xf32>
    %87 = vector.extract_strided_slice %85 {offsets = [0, 32], sizes = [2, 32], strides = [1, 1]} : vector<2x64xf32> to vector<2x32xf32>
    %88 = arith.addf %87, %80 : vector<2x32xf32>
    %89 = math.tanh %88 : vector<2x32xf32>
    %cst_33 = arith.constant dense<0.000000e+00> : vector<2x32xf32>
    %90 = tpu.matmul %89, %4, %cst_33 {dimension_numbers = #tpu.dot_dimension_numbers<[1], [0], [0], [1], [0, 0, 1, 1], [], []>} : vector<2x32xf32>, vector<32x32xf32>, vector<2x32xf32> -> vector<2x32xf32>
    %91 = vector.broadcast %3 : vector<1x32xf32> to vector<2x32xf32>
    %92 = arith.addf %90, %91 : vector<2x32xf32>
    %c10 = arith.constant 10 : index
    %c0_34 = arith.constant 0 : index
    %93 = vector.load %arg5[%c10, %c0_34] : memref<16x32xf32, #tpu.memory_space<vmem>>, vector<2x32xf32>
    tpu.vector_store %arg5[%c10, %c0_34], %89 {strides = array<i32>} : memref<16x32xf32, #tpu.memory_space<vmem>>, vector<2x32xf32>,
    %94 = vector.extract_strided_slice %12 {offsets = [12, 0], sizes = [2, 32], strides = [1, 1]} : vector<16x32xf32> to vector<2x32xf32>
    %95 = arith.addf %94, %86 : vector<2x32xf32>
    %96 = math.tanh %95 : vector<2x32xf32>
    %cst_35 = arith.constant dense<0.000000e+00> : vector<2x64xf32>
    %97 = tpu.matmul %96, %2, %cst_35 {dimension_numbers = #tpu.dot_dimension_numbers<[1], [0], [0], [1], [0, 0, 1, 1], [], []>} : vector<2x32xf32>, vector<32x64xf32>, vector<2x64xf32> -> vector<2x64xf32>
    %98 = vector.extract_strided_slice %97 {offsets = [0, 0], sizes = [2, 32], strides = [1, 1]} : vector<2x64xf32> to vector<2x32xf32>
    %99 = vector.extract_strided_slice %97 {offsets = [0, 32], sizes = [2, 32], strides = [1, 1]} : vector<2x64xf32> to vector<2x32xf32>
    %100 = arith.addf %99, %92 : vector<2x32xf32>
    %101 = math.tanh %100 : vector<2x32xf32>
    %cst_36 = arith.constant dense<0.000000e+00> : vector<2x32xf32>
    %102 = tpu.matmul %101, %4, %cst_36 {dimension_numbers = #tpu.dot_dimension_numbers<[1], [0], [0], [1], [0, 0, 1, 1], [], []>} : vector<2x32xf32>, vector<32x32xf32>, vector<2x32xf32> -> vector<2x32xf32>
    %103 = vector.broadcast %3 : vector<1x32xf32> to vector<2x32xf32>
    %104 = arith.addf %102, %103 : vector<2x32xf32>
    %c12 = arith.constant 12 : index
    %c0_37 = arith.constant 0 : index
    %105 = vector.load %arg5[%c12, %c0_37] : memref<16x32xf32, #tpu.memory_space<vmem>>, vector<2x32xf32>
    tpu.vector_store %arg5[%c12, %c0_37], %101 {strides = array<i32>} : memref<16x32xf32, #tpu.memory_space<vmem>>, vector<2x32xf32>,
    %106 = vector.extract_strided_slice %12 {offsets = [14, 0], sizes = [2, 32], strides = [1, 1]} : vector<16x32xf32> to vector<2x32xf32>
    %107 = arith.addf %106, %98 : vector<2x32xf32>
    %108 = math.tanh %107 : vector<2x32xf32>
    %cst_38 = arith.constant dense<0.000000e+00> : vector<2x64xf32>
    %109 = tpu.matmul %108, %2, %cst_38 {dimension_numbers = #tpu.dot_dimension_numbers<[1], [0], [0], [1], [0, 0, 1, 1], [], []>} : vector<2x32xf32>, vector<32x64xf32>, vector<2x64xf32> -> vector<2x64xf32>
    %110 = vector.extract_strided_slice %109 {offsets = [0, 32], sizes = [2, 32], strides = [1, 1]} : vector<2x64xf32> to vector<2x32xf32>
    %111 = arith.addf %110, %104 : vector<2x32xf32>
    %112 = math.tanh %111 : vector<2x32xf32>
    %c14 = arith.constant 14 : index
    %c0_39 = arith.constant 0 : index
    %113 = vector.load %arg5[%c14, %c0_39] : memref<16x32xf32, #tpu.memory_space<vmem>>, vector<2x32xf32>
    tpu.vector_store %arg5[%c14, %c0_39], %112 {strides = array<i32>} : memref<16x32xf32, #tpu.memory_space<vmem>>, vector<2x32xf32>,
    %c0_40 = arith.constant 0 : index
    %c0_41 = arith.constant 0 : index
    %c0_42 = arith.constant 0 : index
    %114 = vector.load %arg4[%c0_40, %c0_41, %c0_42] : memref<2x2x32xf32, #tpu.memory_space<vmem>>, vector<1x2x32xf32>
    %115 = vector.shape_cast %114 : vector<1x2x32xf32> to vector<2x32xf32>
    %116 = vector.shape_cast %108 : vector<2x32xf32> to vector<1x2x32xf32>
    tpu.vector_store %arg4[%c0_40, %c0_41, %c0_42], %116 {strides = array<i32>} : memref<2x2x32xf32, #tpu.memory_space<vmem>>, vector<1x2x32xf32>,
    %c1_43 = arith.constant 1 : index
    %c0_44 = arith.constant 0 : index
    %c0_45 = arith.constant 0 : index
    %117 = vector.load %arg4[%c1_43, %c0_44, %c0_45] : memref<2x2x32xf32, #tpu.memory_space<vmem>>, vector<1x2x32xf32>
    %118 = vector.shape_cast %117 : vector<1x2x32xf32> to vector<2x32xf32>
    %119 = vector.shape_cast %112 : vector<2x32xf32> to vector<1x2x32xf32>
    tpu.vector_store %arg4[%c1_43, %c0_44, %c0_45], %119 {strides = array<i32>} : memref<2x2x32xf32, #tpu.memory_space<vmem>>, vector<1x2x32xf32>,
    %c0_46 = arith.constant 0 : index
    %c0_47 = arith.constant 0 : index
    %120 = vector.load %arg5[%c0_46, %c0_47] : memref<16x32xf32, #tpu.memory_space<vmem>>, vector<16x32xf32>
    %cst_48 = arith.constant dense<0.000000e+00> : vector<16x128xf32>
    %121 = tpu.matmul %120, %5, %cst_48 {dimension_numbers = #tpu.dot_dimension_numbers<[1], [0], [0], [1], [0, 0, 1, 1], [], []>} : vector<16x32xf32>, vector<32x128xf32>, vector<16x128xf32> -> vector<16x128xf32>
    %122 = vector.broadcast %6 : vector<1x128xf32> to vector<16x128xf32>
    %123 = arith.addf %121, %122 : vector<16x128xf32>
    %c0_49 = arith.constant 0 : index
    %c0_50 = arith.constant 0 : index
    %124 = vector.load %arg3[%c0_49, %c0_50] : memref<16x128xf32, #tpu.memory_space<vmem>>, vector<16x128xf32>
    tpu.vector_store %arg3[%c0_49, %c0_50], %123 {strides = array<i32>} : memref<16x128xf32, #tpu.memory_space<vmem>>, vector<16x128xf32>,
    return
  }
}

</mosaic_0001>

<llo_original>
// kernel: rnn_forward.1
$region0: #{rnn_forward.1}
  #allocation0 [shape = 'u32[]', space=smem, size = 0x4, offset = 0x4, fixed_abs, tag = 'smem constant byte address 0x4 - core index']
  #allocation1 [shape = 'u32[144,128]{1,0:T(1,128)}', space=vmem, size = 0x12000, scoped, tag = 'internal scratch']
  #allocation2 [shape = 'f32[16,32]{1,0:T(8,128)}', space=vmem, size = 0x2000, scoped, tag = 'scratch operand']
  %s0 = inlined_call_operand.vmem [shape: f32[16,1], index: 0, kind: input, shape index: {}]
  %s1 = inlined_call_operand.vmem [shape: f32[2,2,32], index: 1, kind: input, shape index: {}, may-alias: {1,4}]
  %s2 = inlined_call_operand.vmem [shape: f32[128,128], index: 2, kind: input, shape index: {}]
  %s3 = inlined_call_operand.vmem [shape: f32[16,128], index: 3, kind: output, shape index: {0}]
  %s4 = inlined_call_operand.vmem [shape: f32[2,2,32], index: 4, kind: output, shape index: {1}, may-alias: {1,4}]
  %5 = xla_tuple %s3, %s4
  %s6 = sld [smem:[#allocation0]]
  $region30: #{rnn_forward.1} parent=0
    _
  %s8 = ssub.s32 1, %s6
  %s9 = scalar_select 0, %s8, %s6
  // Predicated region
  $region2: #{rnn_forward.1} parent=0 // pred_check
    _
  $region3: #{rnn_forward.1} parent=0 // pred_check_branch
    %11 = sbr.rel (0) target = $region5
  $region4: #{rnn_forward.1} parent=0 // pred_region
    _
  $region5: #{rnn_forward.1} parent=0 // pred_fallthru
    _
  // Predicated region
  $region6: #{rnn_forward.1} parent=0 // pred_check
    _
  $region7: #{rnn_forward.1} parent=0 // pred_check_branch
    %13 = sbr.rel (0) target = $region9
  $region8: #{rnn_forward.1} parent=0 // pred_region
    _
  $region9: #{rnn_forward.1} parent=0 // pred_fallthru
    _
  // Predicated region
  $region10: #{rnn_forward.1} parent=0 // pred_check
    _
  $region11: #{rnn_forward.1} parent=0 // pred_check_branch
    %15 = sbr.rel (0) target = $region13
  $region12: #{rnn_forward.1} parent=0 // pred_region
    _
  $region13: #{rnn_forward.1} parent=0 // pred_fallthru
    _
  %v16 = vld [vmem:[%s2] sm:$0x1]
  %v17 = vld [vmem:[%s2 + $0x8] sm:$0x1]
  %v18 = vld [vmem:[%s2 + $0x10] sm:$0xff]
  %v19 = vld [vmem:[%s2 + $0x18] sm:$0xff]
  %v20 = vld [vmem:[%s2 + $0x20] sm:$0xff]
  %v21 = vld [vmem:[%s2 + $0x28] sm:$0xff]
  %v22 = vld [vmem:[%s2 + $0x30] sm:$0x1]
  %v23 = vld [vmem:[%s2 + $0x38] sm:$0xff]
  %v24 = vld [vmem:[%s2 + $0x40] sm:$0xff]
  %v25 = vld [vmem:[%s2 + $0x48] sm:$0xff]
  %v26 = vld [vmem:[%s2 + $0x50] sm:$0xff]
  %v27 = vld [vmem:[%s2 + $0x58] sm:$0xff]
  %v28 = vld [vmem:[%s2 + $0x60] sm:$0xff]
  %v29 = vld [vmem:[%s2 + $0x68] sm:$0xff]
  %v30 = vld [vmem:[%s2 + $0x70] sm:$0xff]
  %v31 = vld [vmem:[%s2 + $0x78] sm:$0x1]
  %v32 = vld [vmem:[%s0] sm:$0xff]
  %v33 = vld [vmem:[%s0 + $0x8] sm:$0xff]
  %35 = vset.pattern.permute.xlu0 0
  %36 = vperm.xlu0 %35, %v32
  %v37 = vpop.permute.xlu0 %36
  %40 = vset.pattern.permute.xlu0 0
  %41 = vperm.xlu0 %40, %v33
  %v42 = vpop.permute.xlu0 %41
  %v44 = vlaneseq
  %v45 = vshrl.u32 %v44, 7
  %v46 = vsub.s32 0, %v45
  %v47 = vrot.slane %v16, %v46
  %v48 = vmul.f32 %v37, %v47
  %v49 = vmul.f32 %v42, %v47
  %v50 = vlaneseq
  %v51 = vshrl.u32 %v50, 7
  %v52 = vsub.s32 0, %v51
  %v53 = vrot.slane %v17, %v52
  %v54 = vadd.f32 %v48, %v53
  %v55 = vadd.f32 %v49, %v53
  %v56 = vld [vmem:[%s1] sm:$0x3]
  %s57 = scalar_lea.vmem %s1, 2
  %v58 = vld [vmem:[%s57] sm:$0x3]
  %vm59 = vcmask 261120
  %v61 = vsel %vm59, %v56, 0
  %63 = vmatprep.subr.mxu0 0.0
  %64 = vmatpush1.msra.mxu0 %v18
  %65 = vmatprep.subr.mxu0 0.0
  %66 = vmatpush1.msra.mxu0 %v19
  %67 = vmatprep.subr.mxu0 0.0
  %68 = vmatpush1.msra.mxu0 %v20
  %69 = vmatprep.subr.mxu0 0.0
  %70 = vmatpush1.msra.mxu0 %v21
  %71 = vmatprep.subr.mxu0 0.0
  %72 = vmatpush1.msra.mxu0 0.0
  %73 = vmatprep.subr.mxu0 0.0
  %74 = vmatpush1.msra.mxu0 0.0
  %75 = vmatprep.subr.mxu0 0.0
  %76 = vmatpush1.msra.mxu0 0.0
  %77 = vmatprep.subr.mxu0 0.0
  %78 = vmatpush1.msra.mxu0 0.0
  %79 = vmatprep.subr.mxu0 0.0
  %80 = vmatpush1.msra.mxu0 0.0
  %81 = vmatprep.subr.mxu0 0.0
  %82 = vmatpush1.msra.mxu0 0.0
  %83 = vmatprep.subr.mxu0 0.0
  %84 = vmatpush1.msra.mxu0 0.0
  %85 = vmatprep.subr.mxu0 0.0
  %86 = vmatpush1.msra.mxu0 0.0
  %87 = vmatprep.subr.mxu0 0.0
  %88 = vmatpush1.msra.mxu0 0.0
  %89 = vmatprep.subr.mxu0 0.0
  %90 = vmatpush1.msra.mxu0 0.0
  %91 = vmatprep.subr.mxu0 0.0
  %92 = vmatpush1.msra.mxu0 0.0
  %93 = vmatprep.subr.mxu0 0.0
  %94 = vmatpush1.msra.mxu0 0.0
  %95 = vmatprep.subr.mxu0 0.0
  %96 = vmatpush1.msra.mxu0 0.0
  %97 = vmatprep.subr.mxu0 0.0
  %98 = vmatpush1.msra.mxu0 0.0
  %99 = vmatprep.subr.mxu0 0.0
  %100 = vmatpush1.msra.mxu0 0.0
  %101 = vmatprep.subr.mxu0 0.0
  %102 = vmatpush1.msra.mxu0 0.0
  %103 = vmatprep.subr.mxu0 0.0
  %104 = vmatpush1.msra.mxu0 0.0
  %105 = vmatprep.subr.mxu0 0.0
  %106 = vmatpush1.msra.mxu0 0.0
  %107 = vmatprep.subr.mxu0 0.0
  %108 = vmatpush1.msra.mxu0 0.0
  %109 = vmatprep.subr.mxu0 0.0
  %110 = vmatpush1.msra.mxu0 0.0
  %111 = vmatprep.subr.mxu0 0.0
  %112 = vmatpush1.msra.mxu0 0.0
  %113 = vmatprep.subr.mxu0 0.0
  %114 = vmatpush1.msra.mxu0 0.0
  %115 = vmatprep.subr.mxu0 0.0
  %116 = vmatpush1.msra.mxu0 0.0
  %117 = vmatprep.subr.mxu0 0.0
  %118 = vmatpush1.msra.mxu0 0.0
  %119 = vmatprep.subr.mxu0 0.0
  %120 = vmatpush1.msra.mxu0 0.0
  %121 = vmatprep.subr.mxu0 0.0
  %122 = vmatpush1.msra.mxu0 0.0
  %123 = vmatprep.subr.mxu0 0.0
  %124 = vmatpush1.msra.mxu0 0.0
  %125 = vmatprep.subr.mxu0 0.0
  %126 = vmatpush1.msra.mxu0 0.0
  %127 = vmatprep.mubr.f32.mxu0 0.0
  %128 = vmatmul.mubr.f32.gmra.mrb[0].mxu0 %v61
  %v129 = vpop.f32.mrb[0].mxu0
  %v130 = vadd.f32 0.0, %v129
  %v131 = vpop.f32.mrb[0].mxu0
  %132 = vdwg.mxu0
  %v133 = vlaneseq
  %v134 = vshrl.u32 %v133, 7
  %v135 = vsub.s32 0, %v134
  %v136 = vrot.slane %v22, %v135
  %v138 = vsel %vm59, %v58, 0
  %140 = vmatprep.subr.mxu0 0.0
  %141 = vmatpush1.msra.mxu0 %v23
  %142 = vmatprep.subr.mxu0 0.0
  %143 = vmatpush1.msra.mxu0 %v24
  %144 = vmatprep.subr.mxu0 0.0
  %145 = vmatpush1.msra.mxu0 %v25
  %146 = vmatprep.subr.mxu0 0.0
  %147 = vmatpush1.msra.mxu0 %v26
  %148 = vmatprep.subr.mxu0 0.0
  %149 = vmatpush1.msra.mxu0 0.0
  %150 = vmatprep.subr.mxu0 0.0
  %151 = vmatpush1.msra.mxu0 0.0
  %152 = vmatprep.subr.mxu0 0.0
  %153 = vmatpush1.msra.mxu0 0.0
  %154 = vmatprep.subr.mxu0 0.0
  %155 = vmatpush1.msra.mxu0 0.0
  %156 = vmatprep.subr.mxu0 0.0
  %157 = vmatpush1.msra.mxu0 0.0
  %158 = vmatprep.subr.mxu0 0.0
  %159 = vmatpush1.msra.mxu0 0.0
  %160 = vmatprep.subr.mxu0 0.0
  %161 = vmatpush1.msra.mxu0 0.0
  %162 = vmatprep.subr.mxu0 0.0
  %163 = vmatpush1.msra.mxu0 0.0
  %164 = vmatprep.subr.mxu0 0.0
  %165 = vmatpush1.msra.mxu0 0.0
  %166 = vmatprep.subr.mxu0 0.0
  %167 = vmatpush1.msra.mxu0 0.0
  %168 = vmatprep.subr.mxu0 0.0
  %169 = vmatpush1.msra.mxu0 0.0
  %170 = vmatprep.subr.mxu0 0.0
  %171 = vmatpush1.msra.mxu0 0.0
  %172 = vmatprep.subr.mxu0 0.0
  %173 = vmatpush1.msra.mxu0 0.0
  %174 = vmatprep.subr.mxu0 0.0
  %175 = vmatpush1.msra.mxu0 0.0
  %176 = vmatprep.subr.mxu0 0.0
  %177 = vmatpush1.msra.mxu0 0.0
  %178 = vmatprep.subr.mxu0 0.0
  %179 = vmatpush1.msra.mxu0 0.0
  %180 = vmatprep.subr.mxu0 0.0
  %181 = vmatpush1.msra.mxu0 0.0
  %182 = vmatprep.subr.mxu0 0.0
  %183 = vmatpush1.msra.mxu0 0.0
  %184 = vmatprep.subr.mxu0 0.0
  %185 = vmatpush1.msra.mxu0 0.0
  %186 = vmatprep.subr.mxu0 0.0
  %187 = vmatpush1.msra.mxu0 0.0
  %188 = vmatprep.subr.mxu0 0.0
  %189 = vmatpush1.msra.mxu0 0.0
  %190 = vmatprep.subr.mxu0 0.0
  %191 = vmatpush1.msra.mxu0 0.0
  %192 = vmatprep.subr.mxu0 0.0
  %193 = vmatpush1.msra.mxu0 0.0
  %194 = vmatprep.subr.mxu0 0.0
  %195 = vmatpush1.msra.mxu0 0.0
  %196 = vmatprep.subr.mxu0 0.0
  %197 = vmatpush1.msra.mxu0 0.0
  %198 = vmatprep.subr.mxu0 0.0
  %199 = vmatpush1.msra.mxu0 0.0
  %200 = vmatprep.subr.mxu0 0.0
  %201 = vmatpush1.msra.mxu0 0.0
  %202 = vmatprep.subr.mxu0 0.0
  %203 = vmatpush1.msra.mxu0 0.0
  %204 = vmatprep.mubr.f32.mxu0 0.0
  %205 = vmatmul.mubr.f32.gmra.mrb[0].mxu0 %v138
  %v206 = vpop.f32.mrb[0].mxu0
  %v207 = vadd.f32 %v136, %v206
  %v208 = vpop.f32.mrb[0].mxu0
  %209 = vdwg.mxu0
  %v210 = vadd.f32 %v54, %v130
  %v211 = vtanh.pop %v210
  %v213 = vsel %vm59, %v211, 0
  %215 = vmatprep.subr.mxu0 0.0
  %216 = vmatpush1.msra.mxu0 %v18
  %217 = vmatprep.subr.mxu0 0.0
  %218 = vmatpush1.msra.mxu0 %v19
  %219 = vmatprep.subr.mxu0 0.0
  %220 = vmatpush1.msra.mxu0 %v20
  %221 = vmatprep.subr.mxu0 0.0
  %222 = vmatpush1.msra.mxu0 %v21
  %223 = vmatprep.subr.mxu0 0.0
  %224 = vmatpush1.msra.mxu0 0.0
  %225 = vmatprep.subr.mxu0 0.0
  %226 = vmatpush1.msra.mxu0 0.0
  %227 = vmatprep.subr.mxu0 0.0
  %228 = vmatpush1.msra.mxu0 0.0
  %229 = vmatprep.subr.mxu0 0.0
  %230 = vmatpush1.msra.mxu0 0.0
  %231 = vmatprep.subr.mxu0 0.0
  %232 = vmatpush1.msra.mxu0 0.0
  %233 = vmatprep.subr.mxu0 0.0
  %234 = vmatpush1.msra.mxu0 0.0
  %235 = vmatprep.subr.mxu0 0.0
  %236 = vmatpush1.msra.mxu0 0.0
  %237 = vmatprep.subr.mxu0 0.0
  %238 = vmatpush1.msra.mxu0 0.0
  %239 = vmatprep.subr.mxu0 0.0
  %240 = vmatpush1.msra.mxu0 0.0
  %241 = vmatprep.subr.mxu0 0.0
  %242 = vmatpush1.msra.mxu0 0.0
  %243 = vmatprep.subr.mxu0 0.0
  %244 = vmatpush1.msra.mxu0 0.0
  %245 = vmatprep.subr.mxu0 0.0
  %246 = vmatpush1.msra.mxu0 0.0
  %247 = vmatprep.subr.mxu0 0.0
  %248 = vmatpush1.msra.mxu0 0.0
  %249 = vmatprep.subr.mxu0 0.0
  %250 = vmatpush1.msra.mxu0 0.0
  %251 = vmatprep.subr.mxu0 0.0
  %252 = vmatpush1.msra.mxu0 0.0
  %253 = vmatprep.subr.mxu0 0.0
  %254 = vmatpush1.msra.mxu0 0.0
  %255 = vmatprep.subr.mxu0 0.0
  %256 = vmatpush1.msra.mxu0 0.0
  %257 = vmatprep.subr.mxu0 0.0
  %258 = vmatpush1.msra.mxu0 0.0
  %259 = vmatprep.subr.mxu0 0.0
  %260 = vmatpush1.msra.mxu0 0.0
  %261 = vmatprep.subr.mxu0 0.0
  %262 = vmatpush1.msra.mxu0 0.0
  %263 = vmatprep.subr.mxu0 0.0
  %264 = vmatpush1.msra.mxu0 0.0
  %265 = vmatprep.subr.mxu0 0.0
  %266 = vmatpush1.msra.mxu0 0.0
  %267 = vmatprep.subr.mxu0 0.0
  %268 = vmatpush1.msra.mxu0 0.0
  %269 = vmatprep.subr.mxu0 0.0
  %270 = vmatpush1.msra.mxu0 0.0
  %271 = vmatprep.subr.mxu0 0.0
  %272 = vmatpush1.msra.mxu0 0.0
  %273 = vmatprep.subr.mxu0 0.0
  %274 = vmatpush1.msra.mxu0 0.0
  %275 = vmatprep.subr.mxu0 0.0
  %276 = vmatpush1.msra.mxu0 0.0
  %277 = vmatprep.subr.mxu0 0.0
  %278 = vmatpush1.msra.mxu0 0.0
  %279 = vmatprep.mubr.f32.mxu0 0.0
  %280 = vmatmul.mubr.f32.gmra.mrb[0].mxu0 %v213
  %v281 = vpop.f32.mrb[0].mxu0
  %v282 = vadd.f32 0.0, %v281
  %v283 = vpop.f32.mrb[0].mxu0
  %284 = vdwg.mxu0
  %286 = vrot.lane.b32.xlu0 %v207, 32
  %v287 = vpop.permute.xlu0 %286
  %v289 = vadd.f32 %v282, %v287
  %v290 = vtanh.pop %v289
  %292 = vrot.lane.b32.xlu0 %v290, 96
  %v293 = vpop.permute.xlu0 %292
  %v294 = vsel %vm59, %v293, 0
  %296 = vmatprep.subr.mxu0 0.0
  %297 = vmatpush1.msra.mxu0 %v23
  %298 = vmatprep.subr.mxu0 0.0
  %299 = vmatpush1.msra.mxu0 %v24
  %300 = vmatprep.subr.mxu0 0.0
  %301 = vmatpush1.msra.mxu0 %v25
  %302 = vmatprep.subr.mxu0 0.0
  %303 = vmatpush1.msra.mxu0 %v26
  %304 = vmatprep.subr.mxu0 0.0
  %305 = vmatpush1.msra.mxu0 0.0
  %306 = vmatprep.subr.mxu0 0.0
  %307 = vmatpush1.msra.mxu0 0.0
  %308 = vmatprep.subr.mxu0 0.0
  %309 = vmatpush1.msra.mxu0 0.0
  %310 = vmatprep.subr.mxu0 0.0
  %311 = vmatpush1.msra.mxu0 0.0
  %312 = vmatprep.subr.mxu0 0.0
  %313 = vmatpush1.msra.mxu0 0.0
  %314 = vmatprep.subr.mxu0 0.0
  %315 = vmatpush1.msra.mxu0 0.0
  %316 = vmatprep.subr.mxu0 0.0
  %317 = vmatpush1.msra.mxu0 0.0
  %318 = vmatprep.subr.mxu0 0.0
  %319 = vmatpush1.msra.mxu0 0.0
  %320 = vmatprep.subr.mxu0 0.0
  %321 = vmatpush1.msra.mxu0 0.0
  %322 = vmatprep.subr.mxu0 0.0
  %323 = vmatpush1.msra.mxu0 0.0
  %324 = vmatprep.subr.mxu0 0.0
  %325 = vmatpush1.msra.mxu0 0.0
  %326 = vmatprep.subr.mxu0 0.0
  %327 = vmatpush1.msra.mxu0 0.0
  %328 = vmatprep.subr.mxu0 0.0
  %329 = vmatpush1.msra.mxu0 0.0
  %330 = vmatprep.subr.mxu0 0.0
  %331 = vmatpush1.msra.mxu0 0.0
  %332 = vmatprep.subr.mxu0 0.0
  %333 = vmatpush1.msra.mxu0 0.0
  %334 = vmatprep.subr.mxu0 0.0
  %335 = vmatpush1.msra.mxu0 0.0
  %336 = vmatprep.subr.mxu0 0.0
  %337 = vmatpush1.msra.mxu0 0.0
  %338 = vmatprep.subr.mxu0 0.0
  %339 = vmatpush1.msra.mxu0 0.0
  %340 = vmatprep.subr.mxu0 0.0
  %341 = vmatpush1.msra.mxu0 0.0
  %342 = vmatprep.subr.mxu0 0.0
  %343 = vmatpush1.msra.mxu0 0.0
  %344 = vmatprep.subr.mxu0 0.0
  %345 = vmatpush1.msra.mxu0 0.0
  %346 = vmatprep.subr.mxu0 0.0
  %347 = vmatpush1.msra.mxu0 0.0
  %348 = vmatprep.subr.mxu0 0.0
  %349 = vmatpush1.msra.mxu0 0.0
  %350 = vmatprep.subr.mxu0 0.0
  %351 = vmatpush1.msra.mxu0 0.0
  %352 = vmatprep.subr.mxu0 0.0
  %353 = vmatpush1.msra.mxu0 0.0
  %354 = vmatprep.subr.mxu0 0.0
  %355 = vmatpush1.msra.mxu0 0.0
  %356 = vmatprep.subr.mxu0 0.0
  %357 = vmatpush1.msra.mxu0 0.0
  %358 = vmatprep.subr.mxu0 0.0
  %359 = vmatpush1.msra.mxu0 0.0
  %360 = vmatprep.mubr.f32.mxu0 0.0
  %361 = vmatmul.mubr.f32.gmra.mrb[0].mxu0 %v294
  %v362 = vpop.f32.mrb[0].mxu0
  %v363 = vadd.f32 %v136, %v362
  %v364 = vpop.f32.mrb[0].mxu0
  %365 = vdwg.mxu0
  %vm367 = vcmask 254976
  %368 = vst.msk [vmem:[#allocation2] sm:$0x3] %vm367, %v293
  %v370 = vrot.slane %v282, 6
  %v372 = vadd.f32 %v54, %v370
  %v373 = vtanh.pop %v372
  %v375 = vrot.slane %v373, 2
  %v376 = vsel %vm59, %v375, 0
  %378 = vmatprep.subr.mxu0 0.0
  %379 = vmatpush1.msra.mxu0 %v18
  %380 = vmatprep.subr.mxu0 0.0
  %381 = vmatpush1.msra.mxu0 %v19
  %382 = vmatprep.subr.mxu0 0.0
  %383 = vmatpush1.msra.mxu0 %v20
  %384 = vmatprep.subr.mxu0 0.0
  %385 = vmatpush1.msra.mxu0 %v21
  %386 = vmatprep.subr.mxu0 0.0
  %387 = vmatpush1.msra.mxu0 0.0
  %388 = vmatprep.subr.mxu0 0.0
  %389 = vmatpush1.msra.mxu0 0.0
  %390 = vmatprep.subr.mxu0 0.0
  %391 = vmatpush1.msra.mxu0 0.0
  %392 = vmatprep.subr.mxu0 0.0
  %393 = vmatpush1.msra.mxu0 0.0
  %394 = vmatprep.subr.mxu0 0.0
  %395 = vmatpush1.msra.mxu0 0.0
  %396 = vmatprep.subr.mxu0 0.0
  %397 = vmatpush1.msra.mxu0 0.0
  %398 = vmatprep.subr.mxu0 0.0
  %399 = vmatpush1.msra.mxu0 0.0
  %400 = vmatprep.subr.mxu0 0.0
  %401 = vmatpush1.msra.mxu0 0.0
  %402 = vmatprep.subr.mxu0 0.0
  %403 = vmatpush1.msra.mxu0 0.0
  %404 = vmatprep.subr.mxu0 0.0
  %405 = vmatpush1.msra.mxu0 0.0
  %406 = vmatprep.subr.mxu0 0.0
  %407 = vmatpush1.msra.mxu0 0.0
  %408 = vmatprep.subr.mxu0 0.0
  %409 = vmatpush1.msra.mxu0 0.0
  %410 = vmatprep.subr.mxu0 0.0
  %411 = vmatpush1.msra.mxu0 0.0
  %412 = vmatprep.subr.mxu0 0.0
  %413 = vmatpush1.msra.mxu0 0.0
  %414 = vmatprep.subr.mxu0 0.0
  %415 = vmatpush1.msra.mxu0 0.0
  %416 = vmatprep.subr.mxu0 0.0
  %417 = vmatpush1.msra.mxu0 0.0
  %418 = vmatprep.subr.mxu0 0.0
  %419 = vmatpush1.msra.mxu0 0.0
  %420 = vmatprep.subr.mxu0 0.0
  %421 = vmatpush1.msra.mxu0 0.0
  %422 = vmatprep.subr.mxu0 0.0
  %423 = vmatpush1.msra.mxu0 0.0
  %424 = vmatprep.subr.mxu0 0.0
  %425 = vmatpush1.msra.mxu0 0.0
  %426 = vmatprep.subr.mxu0 0.0
  %427 = vmatpush1.msra.mxu0 0.0
  %428 = vmatprep.subr.mxu0 0.0
  %429 = vmatpush1.msra.mxu0 0.0
  %430 = vmatprep.subr.mxu0 0.0
  %431 = vmatpush1.msra.mxu0 0.0
  %432 = vmatprep.subr.mxu0 0.0
  %433 = vmatpush1.msra.mxu0 0.0
  %434 = vmatprep.subr.mxu0 0.0
  %435 = vmatpush1.msra.mxu0 0.0
  %436 = vmatprep.subr.mxu0 0.0
  %437 = vmatpush1.msra.mxu0 0.0
  %438 = vmatprep.subr.mxu0 0.0
  %439 = vmatpush1.msra.mxu0 0.0
  %440 = vmatprep.subr.mxu0 0.0
  %441 = vmatpush1.msra.mxu0 0.0
  %442 = vmatprep.mubr.f32.mxu0 0.0
  %443 = vmatmul.mubr.f32.gmra.mrb[0].mxu0 %v376
  %v444 = vpop.f32.mrb[0].mxu0
  %v445 = vadd.f32 0.0, %v444
  %v446 = vpop.f32.mrb[0].mxu0
  %447 = vdwg.mxu0
  %449 = vrot.lane.b32.xlu0 %v363, 32
  %v450 = vpop.permute.xlu0 %449
  %v452 = vadd.f32 %v445, %v450
  %v453 = vtanh.pop %v452
  %455 = vrot.lane.b32.xlu0 %v453, 96
  %v456 = vpop.permute.xlu0 %455
  %v457 = vsel %vm59, %v456, 0
  %459 = vmatprep.subr.mxu0 0.0
  %460 = vmatpush1.msra.mxu0 %v23
  %461 = vmatprep.subr.mxu0 0.0
  %462 = vmatpush1.msra.mxu0 %v24
  %463 = vmatprep.subr.mxu0 0.0
  %464 = vmatpush1.msra.mxu0 %v25
  %465 = vmatprep.subr.mxu0 0.0
  %466 = vmatpush1.msra.mxu0 %v26
  %467 = vmatprep.subr.mxu0 0.0
  %468 = vmatpush1.msra.mxu0 0.0
  %469 = vmatprep.subr.mxu0 0.0
  %470 = vmatpush1.msra.mxu0 0.0
  %471 = vmatprep.subr.mxu0 0.0
  %472 = vmatpush1.msra.mxu0 0.0
  %473 = vmatprep.subr.mxu0 0.0
  %474 = vmatpush1.msra.mxu0 0.0
  %475 = vmatprep.subr.mxu0 0.0
  %476 = vmatpush1.msra.mxu0 0.0
  %477 = vmatprep.subr.mxu0 0.0
  %478 = vmatpush1.msra.mxu0 0.0
  %479 = vmatprep.subr.mxu0 0.0
  %480 = vmatpush1.msra.mxu0 0.0
  %481 = vmatprep.subr.mxu0 0.0
  %482 = vmatpush1.msra.mxu0 0.0
  %483 = vmatprep.subr.mxu0 0.0
  %484 = vmatpush1.msra.mxu0 0.0
  %485 = vmatprep.subr.mxu0 0.0
  %486 = vmatpush1.msra.mxu0 0.0
  %487 = vmatprep.subr.mxu0 0.0
  %488 = vmatpush1.msra.mxu0 0.0
  %489 = vmatprep.subr.mxu0 0.0
  %490 = vmatpush1.msra.mxu0 0.0
  %491 = vmatprep.subr.mxu0 0.0
  %492 = vmatpush1.msra.mxu0 0.0
  %493 = vmatprep.subr.mxu0 0.0
  %494 = vmatpush1.msra.mxu0 0.0
  %495 = vmatprep.subr.mxu0 0.0
  %496 = vmatpush1.msra.mxu0 0.0
  %497 = vmatprep.subr.mxu0 0.0
  %498 = vmatpush1.msra.mxu0 0.0
  %499 = vmatprep.subr.mxu0 0.0
  %500 = vmatpush1.msra.mxu0 0.0
  %501 = vmatprep.subr.mxu0 0.0
  %502 = vmatpush1.msra.mxu0 0.0
  %503 = vmatprep.subr.mxu0 0.0
  %504 = vmatpush1.msra.mxu0 0.0
  %505 = vmatprep.subr.mxu0 0.0
  %506 = vmatpush1.msra.mxu0 0.0
  %507 = vmatprep.subr.mxu0 0.0
  %508 = vmatpush1.msra.mxu0 0.0
  %509 = vmatprep.subr.mxu0 0.0
  %510 = vmatpush1.msra.mxu0 0.0
  %511 = vmatprep.subr.mxu0 0.0
  %512 = vmatpush1.msra.mxu0 0.0
  %513 = vmatprep.subr.mxu0 0.0
  %514 = vmatpush1.msra.mxu0 0.0
  %515 = vmatprep.subr.mxu0 0.0
  %516 = vmatpush1.msra.mxu0 0.0
  %517 = vmatprep.subr.mxu0 0.0
  %518 = vmatpush1.msra.mxu0 0.0
  %519 = vmatprep.subr.mxu0 0.0
  %520 = vmatpush1.msra.mxu0 0.0
  %521 = vmatprep.subr.mxu0 0.0
  %522 = vmatpush1.msra.mxu0 0.0
  %523 = vmatprep.mubr.f32.mxu0 0.0
  %524 = vmatmul.mubr.f32.gmra.mrb[0].mxu0 %v457
  %v525 = vpop.f32.mrb[0].mxu0
  %v526 = vadd.f32 %v136, %v525
  %v527 = vpop.f32.mrb[0].mxu0
  %528 = vdwg.mxu0
  %530 = vst.msk [vmem:[#allocation2 + $0x2] sm:$0x3] %vm367, %v456
  %v532 = vrot.slane %v445, 4
  %v534 = vadd.f32 %v54, %v532
  %v535 = vtanh.pop %v534
  %v537 = vrot.slane %v535, 4
  %v538 = vsel %vm59, %v537, 0
  %540 = vmatprep.subr.mxu0 0.0
  %541 = vmatpush1.msra.mxu0 %v18
  %542 = vmatprep.subr.mxu0 0.0
  %543 = vmatpush1.msra.mxu0 %v19
  %544 = vmatprep.subr.mxu0 0.0
  %545 = vmatpush1.msra.mxu0 %v20
  %546 = vmatprep.subr.mxu0 0.0
  %547 = vmatpush1.msra.mxu0 %v21
  %548 = vmatprep.subr.mxu0 0.0
  %549 = vmatpush1.msra.mxu0 0.0
  %550 = vmatprep.subr.mxu0 0.0
  %551 = vmatpush1.msra.mxu0 0.0
  %552 = vmatprep.subr.mxu0 0.0
  %553 = vmatpush1.msra.mxu0 0.0
  %554 = vmatprep.subr.mxu0 0.0
  %555 = vmatpush1.msra.mxu0 0.0
  %556 = vmatprep.subr.mxu0 0.0
  %557 = vmatpush1.msra.mxu0 0.0
  %558 = vmatprep.subr.mxu0 0.0
  %559 = vmatpush1.msra.mxu0 0.0
  %560 = vmatprep.subr.mxu0 0.0
  %561 = vmatpush1.msra.mxu0 0.0
  %562 = vmatprep.subr.mxu0 0.0
  %563 = vmatpush1.msra.mxu0 0.0
  %564 = vmatprep.subr.mxu0 0.0
  %565 = vmatpush1.msra.mxu0 0.0
  %566 = vmatprep.subr.mxu0 0.0
  %567 = vmatpush1.msra.mxu0 0.0
  %568 = vmatprep.subr.mxu0 0.0
  %569 = vmatpush1.msra.mxu0 0.0
  %570 = vmatprep.subr.mxu0 0.0
  %571 = vmatpush1.msra.mxu0 0.0
  %572 = vmatprep.subr.mxu0 0.0
  %573 = vmatpush1.msra.mxu0 0.0
  %574 = vmatprep.subr.mxu0 0.0
  %575 = vmatpush1.msra.mxu0 0.0
  %576 = vmatprep.subr.mxu0 0.0
  %577 = vmatpush1.msra.mxu0 0.0
  %578 = vmatprep.subr.mxu0 0.0
  %579 = vmatpush1.msra.mxu0 0.0
  %580 = vmatprep.subr.mxu0 0.0
  %581 = vmatpush1.msra.mxu0 0.0
  %582 = vmatprep.subr.mxu0 0.0
  %583 = vmatpush1.msra.mxu0 0.0
  %584 = vmatprep.subr.mxu0 0.0
  %585 = vmatpush1.msra.mxu0 0.0
  %586 = vmatprep.subr.mxu0 0.0
  %587 = vmatpush1.msra.mxu0 0.0
  %588 = vmatprep.subr.mxu0 0.0
  %589 = vmatpush1.msra.mxu0 0.0
  %590 = vmatprep.subr.mxu0 0.0
  %591 = vmatpush1.msra.mxu0 0.0
  %592 = vmatprep.subr.mxu0 0.0
  %593 = vmatpush1.msra.mxu0 0.0
  %594 = vmatprep.subr.mxu0 0.0
  %595 = vmatpush1.msra.mxu0 0.0
  %596 = vmatprep.subr.mxu0 0.0
  %597 = vmatpush1.msra.mxu0 0.0
  %598 = vmatprep.subr.mxu0 0.0
  %599 = vmatpush1.msra.mxu0 0.0
  %600 = vmatprep.subr.mxu0 0.0
  %601 = vmatpush1.msra.mxu0 0.0
  %602 = vmatprep.subr.mxu0 0.0
  %603 = vmatpush1.msra.mxu0 0.0
  %604 = vmatprep.mubr.f32.mxu0 0.0
  %605 = vmatmul.mubr.f32.gmra.mrb[0].mxu0 %v538
  %v606 = vpop.f32.mrb[0].mxu0
  %v607 = vadd.f32 0.0, %v606
  %v608 = vpop.f32.mrb[0].mxu0
  %609 = vdwg.mxu0
  %611 = vrot.lane.b32.xlu0 %v526, 32
  %v612 = vpop.permute.xlu0 %611
  %v614 = vadd.f32 %v607, %v612
  %v615 = vtanh.pop %v614
  %617 = vrot.lane.b32.xlu0 %v615, 96
  %v618 = vpop.permute.xlu0 %617
  %v619 = vsel %vm59, %v618, 0
  %621 = vmatprep.subr.mxu0 0.0
  %622 = vmatpush1.msra.mxu0 %v23
  %623 = vmatprep.subr.mxu0 0.0
  %624 = vmatpush1.msra.mxu0 %v24
  %625 = vmatprep.subr.mxu0 0.0
  %626 = vmatpush1.msra.mxu0 %v25
  %627 = vmatprep.subr.mxu0 0.0
  %628 = vmatpush1.msra.mxu0 %v26
  %629 = vmatprep.subr.mxu0 0.0
  %630 = vmatpush1.msra.mxu0 0.0
  %631 = vmatprep.subr.mxu0 0.0
  %632 = vmatpush1.msra.mxu0 0.0
  %633 = vmatprep.subr.mxu0 0.0
  %634 = vmatpush1.msra.mxu0 0.0
  %635 = vmatprep.subr.mxu0 0.0
  %636 = vmatpush1.msra.mxu0 0.0
  %637 = vmatprep.subr.mxu0 0.0
  %638 = vmatpush1.msra.mxu0 0.0
  %639 = vmatprep.subr.mxu0 0.0
  %640 = vmatpush1.msra.mxu0 0.0
  %641 = vmatprep.subr.mxu0 0.0
  %642 = vmatpush1.msra.mxu0 0.0
  %643 = vmatprep.subr.mxu0 0.0
  %644 = vmatpush1.msra.mxu0 0.0
  %645 = vmatprep.subr.mxu0 0.0
  %646 = vmatpush1.msra.mxu0 0.0
  %647 = vmatprep.subr.mxu0 0.0
  %648 = vmatpush1.msra.mxu0 0.0
  %649 = vmatprep.subr.mxu0 0.0
  %650 = vmatpush1.msra.mxu0 0.0
  %651 = vmatprep.subr.mxu0 0.0
  %652 = vmatpush1.msra.mxu0 0.0
  %653 = vmatprep.subr.mxu0 0.0
  %654 = vmatpush1.msra.mxu0 0.0
  %655 = vmatprep.subr.mxu0 0.0
  %656 = vmatpush1.msra.mxu0 0.0
  %657 = vmatprep.subr.mxu0 0.0
  %658 = vmatpush1.msra.mxu0 0.0
  %659 = vmatprep.subr.mxu0 0.0
  %660 = vmatpush1.msra.mxu0 0.0
  %661 = vmatprep.subr.mxu0 0.0
  %662 = vmatpush1.msra.mxu0 0.0
  %663 = vmatprep.subr.mxu0 0.0
  %664 = vmatpush1.msra.mxu0 0.0
  %665 = vmatprep.subr.mxu0 0.0
  %666 = vmatpush1.msra.mxu0 0.0
  %667 = vmatprep.subr.mxu0 0.0
  %668 = vmatpush1.msra.mxu0 0.0
  %669 = vmatprep.subr.mxu0 0.0
  %670 = vmatpush1.msra.mxu0 0.0
  %671 = vmatprep.subr.mxu0 0.0
  %672 = vmatpush1.msra.mxu0 0.0
  %673 = vmatprep.subr.mxu0 0.0
  %674 = vmatpush1.msra.mxu0 0.0
  %675 = vmatprep.subr.mxu0 0.0
  %676 = vmatpush1.msra.mxu0 0.0
  %677 = vmatprep.subr.mxu0 0.0
  %678 = vmatpush1.msra.mxu0 0.0
  %679 = vmatprep.subr.mxu0 0.0
  %680 = vmatpush1.msra.mxu0 0.0
  %681 = vmatprep.subr.mxu0 0.0
  %682 = vmatpush1.msra.mxu0 0.0
  %683 = vmatprep.subr.mxu0 0.0
  %684 = vmatpush1.msra.mxu0 0.0
  %685 = vmatprep.mubr.f32.mxu0 0.0
  %686 = vmatmul.mubr.f32.gmra.mrb[0].mxu0 %v619
  %v687 = vpop.f32.mrb[0].mxu0
  %v688 = vadd.f32 %v136, %v687
  %v689 = vpop.f32.mrb[0].mxu0
  %690 = vdwg.mxu0
  %692 = vst.msk [vmem:[#allocation2 + $0x4] sm:$0x3] %vm367, %v618
  %v694 = vrot.slane %v607, 2
  %v696 = vadd.f32 %v54, %v694
  %v697 = vtanh.pop %v696
  %v699 = vrot.slane %v697, 6
  %v700 = vsel %vm59, %v699, 0
  %702 = vmatprep.subr.mxu0 0.0
  %703 = vmatpush1.msra.mxu0 %v18
  %704 = vmatprep.subr.mxu0 0.0
  %705 = vmatpush1.msra.mxu0 %v19
  %706 = vmatprep.subr.mxu0 0.0
  %707 = vmatpush1.msra.mxu0 %v20
  %708 = vmatprep.subr.mxu0 0.0
  %709 = vmatpush1.msra.mxu0 %v21
  %710 = vmatprep.subr.mxu0 0.0
  %711 = vmatpush1.msra.mxu0 0.0
  %712 = vmatprep.subr.mxu0 0.0
  %713 = vmatpush1.msra.mxu0 0.0
  %714 = vmatprep.subr.mxu0 0.0
  %715 = vmatpush1.msra.mxu0 0.0
  %716 = vmatprep.subr.mxu0 0.0
  %717 = vmatpush1.msra.mxu0 0.0
  %718 = vmatprep.subr.mxu0 0.0
  %719 = vmatpush1.msra.mxu0 0.0
  %720 = vmatprep.subr.mxu0 0.0
  %721 = vmatpush1.msra.mxu0 0.0
  %722 = vmatprep.subr.mxu0 0.0
  %723 = vmatpush1.msra.mxu0 0.0
  %724 = vmatprep.subr.mxu0 0.0
  %725 = vmatpush1.msra.mxu0 0.0
  %726 = vmatprep.subr.mxu0 0.0
  %727 = vmatpush1.msra.mxu0 0.0
  %728 = vmatprep.subr.mxu0 0.0
  %729 = vmatpush1.msra.mxu0 0.0
  %730 = vmatprep.subr.mxu0 0.0
  %731 = vmatpush1.msra.mxu0 0.0
  %732 = vmatprep.subr.mxu0 0.0
  %733 = vmatpush1.msra.mxu0 0.0
  %734 = vmatprep.subr.mxu0 0.0
  %735 = vmatpush1.msra.mxu0 0.0
  %736 = vmatprep.subr.mxu0 0.0
  %737 = vmatpush1.msra.mxu0 0.0
  %738 = vmatprep.subr.mxu0 0.0
  %739 = vmatpush1.msra.mxu0 0.0
  %740 = vmatprep.subr.mxu0 0.0
  %741 = vmatpush1.msra.mxu0 0.0
  %742 = vmatprep.subr.mxu0 0.0
  %743 = vmatpush1.msra.mxu0 0.0
  %744 = vmatprep.subr.mxu0 0.0
  %745 = vmatpush1.msra.mxu0 0.0
  %746 = vmatprep.subr.mxu0 0.0
  %747 = vmatpush1.msra.mxu0 0.0
  %748 = vmatprep.subr.mxu0 0.0
  %749 = vmatpush1.msra.mxu0 0.0
  %750 = vmatprep.subr.mxu0 0.0
  %751 = vmatpush1.msra.mxu0 0.0
  %752 = vmatprep.subr.mxu0 0.0
  %753 = vmatpush1.msra.mxu0 0.0
  %754 = vmatprep.subr.mxu0 0.0
  %755 = vmatpush1.msra.mxu0 0.0
  %756 = vmatprep.subr.mxu0 0.0
  %757 = vmatpush1.msra.mxu0 0.0
  %758 = vmatprep.subr.mxu0 0.0
  %759 = vmatpush1.msra.mxu0 0.0
  %760 = vmatprep.subr.mxu0 0.0
  %761 = vmatpush1.msra.mxu0 0.0
  %762 = vmatprep.subr.mxu0 0.0
  %763 = vmatpush1.msra.mxu0 0.0
  %764 = vmatprep.subr.mxu0 0.0
  %765 = vmatpush1.msra.mxu0 0.0
  %766 = vmatprep.mubr.f32.mxu0 0.0
  %767 = vmatmul.mubr.f32.gmra.mrb[0].mxu0 %v700
  %v768 = vpop.f32.mrb[0].mxu0
  %v769 = vadd.f32 0.0, %v768
  %v770 = vpop.f32.mrb[0].mxu0
  %771 = vdwg.mxu0
  %773 = vrot.lane.b32.xlu0 %v688, 32
  %v774 = vpop.permute.xlu0 %773
  %v776 = vadd.f32 %v769, %v774
  %v777 = vtanh.pop %v776
  %779 = vrot.lane.b32.xlu0 %v777, 96
  %v780 = vpop.permute.xlu0 %779
  %v781 = vsel %vm59, %v780, 0
  %783 = vmatprep.subr.mxu0 0.0
  %784 = vmatpush1.msra.mxu0 %v23
  %785 = vmatprep.subr.mxu0 0.0
  %786 = vmatpush1.msra.mxu0 %v24
  %787 = vmatprep.subr.mxu0 0.0
  %788 = vmatpush1.msra.mxu0 %v25
  %789 = vmatprep.subr.mxu0 0.0
  %790 = vmatpush1.msra.mxu0 %v26
  %791 = vmatprep.subr.mxu0 0.0
  %792 = vmatpush1.msra.mxu0 0.0
  %793 = vmatprep.subr.mxu0 0.0
  %794 = vmatpush1.msra.mxu0 0.0
  %795 = vmatprep.subr.mxu0 0.0
  %796 = vmatpush1.msra.mxu0 0.0
  %797 = vmatprep.subr.mxu0 0.0
  %798 = vmatpush1.msra.mxu0 0.0
  %799 = vmatprep.subr.mxu0 0.0
  %800 = vmatpush1.msra.mxu0 0.0
  %801 = vmatprep.subr.mxu0 0.0
  %802 = vmatpush1.msra.mxu0 0.0
  %803 = vmatprep.subr.mxu0 0.0
  %804 = vmatpush1.msra.mxu0 0.0
  %805 = vmatprep.subr.mxu0 0.0
  %806 = vmatpush1.msra.mxu0 0.0
  %807 = vmatprep.subr.mxu0 0.0
  %808 = vmatpush1.msra.mxu0 0.0
  %809 = vmatprep.subr.mxu0 0.0
  %810 = vmatpush1.msra.mxu0 0.0
  %811 = vmatprep.subr.mxu0 0.0
  %812 = vmatpush1.msra.mxu0 0.0
  %813 = vmatprep.subr.mxu0 0.0
  %814 = vmatpush1.msra.mxu0 0.0
  %815 = vmatprep.subr.mxu0 0.0
  %816 = vmatpush1.msra.mxu0 0.0
  %817 = vmatprep.subr.mxu0 0.0
  %818 = vmatpush1.msra.mxu0 0.0
  %819 = vmatprep.subr.mxu0 0.0
  %820 = vmatpush1.msra.mxu0 0.0
  %821 = vmatprep.subr.mxu0 0.0
  %822 = vmatpush1.msra.mxu0 0.0
  %823 = vmatprep.subr.mxu0 0.0
  %824 = vmatpush1.msra.mxu0 0.0
  %825 = vmatprep.subr.mxu0 0.0
  %826 = vmatpush1.msra.mxu0 0.0
  %827 = vmatprep.subr.mxu0 0.0
  %828 = vmatpush1.msra.mxu0 0.0
  %829 = vmatprep.subr.mxu0 0.0
  %830 = vmatpush1.msra.mxu0 0.0
  %831 = vmatprep.subr.mxu0 0.0
  %832 = vmatpush1.msra.mxu0 0.0
  %833 = vmatprep.subr.mxu0 0.0
  %834 = vmatpush1.msra.mxu0 0.0
  %835 = vmatprep.subr.mxu0 0.0
  %836 = vmatpush1.msra.mxu0 0.0
  %837 = vmatprep.subr.mxu0 0.0
  %838 = vmatpush1.msra.mxu0 0.0
  %839 = vmatprep.subr.mxu0 0.0
  %840 = vmatpush1.msra.mxu0 0.0
  %841 = vmatprep.subr.mxu0 0.0
  %842 = vmatpush1.msra.mxu0 0.0
  %843 = vmatprep.subr.mxu0 0.0
  %844 = vmatpush1.msra.mxu0 0.0
  %845 = vmatprep.subr.mxu0 0.0
  %846 = vmatpush1.msra.mxu0 0.0
  %847 = vmatprep.mubr.f32.mxu0 0.0
  %848 = vmatmul.mubr.f32.gmra.mrb[0].mxu0 %v781
  %v849 = vpop.f32.mrb[0].mxu0
  %v850 = vadd.f32 %v136, %v849
  %v851 = vpop.f32.mrb[0].mxu0
  %852 = vdwg.mxu0
  %854 = vst.msk [vmem:[#allocation2 + $0x6] sm:$0x3] %vm367, %v780
  %v855 = vadd.f32 %v55, %v769
  %v856 = vtanh.pop %v855
  %v858 = vsel %vm59, %v856, 0
  %860 = vmatprep.subr.mxu0 0.0
  %861 = vmatpush1.msra.mxu0 %v18
  %862 = vmatprep.subr.mxu0 0.0
  %863 = vmatpush1.msra.mxu0 %v19
  %864 = vmatprep.subr.mxu0 0.0
  %865 = vmatpush1.msra.mxu0 %v20
  %866 = vmatprep.subr.mxu0 0.0
  %867 = vmatpush1.msra.mxu0 %v21
  %868 = vmatprep.subr.mxu0 0.0
  %869 = vmatpush1.msra.mxu0 0.0
  %870 = vmatprep.subr.mxu0 0.0
  %871 = vmatpush1.msra.mxu0 0.0
  %872 = vmatprep.subr.mxu0 0.0
  %873 = vmatpush1.msra.mxu0 0.0
  %874 = vmatprep.subr.mxu0 0.0
  %875 = vmatpush1.msra.mxu0 0.0
  %876 = vmatprep.subr.mxu0 0.0
  %877 = vmatpush1.msra.mxu0 0.0
  %878 = vmatprep.subr.mxu0 0.0
  %879 = vmatpush1.msra.mxu0 0.0
  %880 = vmatprep.subr.mxu0 0.0
  %881 = vmatpush1.msra.mxu0 0.0
  %882 = vmatprep.subr.mxu0 0.0
  %883 = vmatpush1.msra.mxu0 0.0
  %884 = vmatprep.subr.mxu0 0.0
  %885 = vmatpush1.msra.mxu0 0.0
  %886 = vmatprep.subr.mxu0 0.0
  %887 = vmatpush1.msra.mxu0 0.0
  %888 = vmatprep.subr.mxu0 0.0
  %889 = vmatpush1.msra.mxu0 0.0
  %890 = vmatprep.subr.mxu0 0.0
  %891 = vmatpush1.msra.mxu0 0.0
  %892 = vmatprep.subr.mxu0 0.0
  %893 = vmatpush1.msra.mxu0 0.0
  %894 = vmatprep.subr.mxu0 0.0
  %895 = vmatpush1.msra.mxu0 0.0
  %896 = vmatprep.subr.mxu0 0.0
  %897 = vmatpush1.msra.mxu0 0.0
  %898 = vmatprep.subr.mxu0 0.0
  %899 = vmatpush1.msra.mxu0 0.0
  %900 = vmatprep.subr.mxu0 0.0
  %901 = vmatpush1.msra.mxu0 0.0
  %902 = vmatprep.subr.mxu0 0.0
  %903 = vmatpush1.msra.mxu0 0.0
  %904 = vmatprep.subr.mxu0 0.0
  %905 = vmatpush1.msra.mxu0 0.0
  %906 = vmatprep.subr.mxu0 0.0
  %907 = vmatpush1.msra.mxu0 0.0
  %908 = vmatprep.subr.mxu0 0.0
  %909 = vmatpush1.msra.mxu0 0.0
  %910 = vmatprep.subr.mxu0 0.0
  %911 = vmatpush1.msra.mxu0 0.0
  %912 = vmatprep.subr.mxu0 0.0
  %913 = vmatpush1.msra.mxu0 0.0
  %914 = vmatprep.subr.mxu0 0.0
  %915 = vmatpush1.msra.mxu0 0.0
  %916 = vmatprep.subr.mxu0 0.0
  %917 = vmatpush1.msra.mxu0 0.0
  %918 = vmatprep.subr.mxu0 0.0
  %919 = vmatpush1.msra.mxu0 0.0
  %920 = vmatprep.subr.mxu0 0.0
  %921 = vmatpush1.msra.mxu0 0.0
  %922 = vmatprep.subr.mxu0 0.0
  %923 = vmatpush1.msra.mxu0 0.0
  %924 = vmatprep.mubr.f32.mxu0 0.0
  %925 = vmatmul.mubr.f32.gmra.mrb[0].mxu0 %v858
  %v926 = vpop.f32.mrb[0].mxu0
  %v927 = vadd.f32 0.0, %v926
  %v928 = vpop.f32.mrb[0].mxu0
  %929 = vdwg.mxu0
  %931 = vrot.lane.b32.xlu0 %v850, 32
  %v932 = vpop.permute.xlu0 %931
  %v934 = vadd.f32 %v927, %v932
  %v935 = vtanh.pop %v934
  %937 = vrot.lane.b32.xlu0 %v935, 96
  %v938 = vpop.permute.xlu0 %937
  %v939 = vsel %vm59, %v938, 0
  %941 = vmatprep.subr.mxu0 0.0
  %942 = vmatpush1.msra.mxu0 %v23
  %943 = vmatprep.subr.mxu0 0.0
  %944 = vmatpush1.msra.mxu0 %v24
  %945 = vmatprep.subr.mxu0 0.0
  %946 = vmatpush1.msra.mxu0 %v25
  %947 = vmatprep.subr.mxu0 0.0
  %948 = vmatpush1.msra.mxu0 %v26
  %949 = vmatprep.subr.mxu0 0.0
  %950 = vmatpush1.msra.mxu0 0.0
  %951 = vmatprep.subr.mxu0 0.0
  %952 = vmatpush1.msra.mxu0 0.0
  %953 = vmatprep.subr.mxu0 0.0
  %954 = vmatpush1.msra.mxu0 0.0
  %955 = vmatprep.subr.mxu0 0.0
  %956 = vmatpush1.msra.mxu0 0.0
  %957 = vmatprep.subr.mxu0 0.0
  %958 = vmatpush1.msra.mxu0 0.0
  %959 = vmatprep.subr.mxu0 0.0
  %960 = vmatpush1.msra.mxu0 0.0
  %961 = vmatprep.subr.mxu0 0.0
  %962 = vmatpush1.msra.mxu0 0.0
  %963 = vmatprep.subr.mxu0 0.0
  %964 = vmatpush1.msra.mxu0 0.0
  %965 = vmatprep.subr.mxu0 0.0
  %966 = vmatpush1.msra.mxu0 0.0
  %967 = vmatprep.subr.mxu0 0.0
  %968 = vmatpush1.msra.mxu0 0.0
  %969 = vmatprep.subr.mxu0 0.0
  %970 = vmatpush1.msra.mxu0 0.0
  %971 = vmatprep.subr.mxu0 0.0
  %972 = vmatpush1.msra.mxu0 0.0
  %973 = vmatprep.subr.mxu0 0.0
  %974 = vmatpush1.msra.mxu0 0.0
  %975 = vmatprep.subr.mxu0 0.0
  %976 = vmatpush1.msra.mxu0 0.0
  %977 = vmatprep.subr.mxu0 0.0
  %978 = vmatpush1.msra.mxu0 0.0
  %979 = vmatprep.subr.mxu0 0.0
  %980 = vmatpush1.msra.mxu0 0.0
  %981 = vmatprep.subr.mxu0 0.0
  %982 = vmatpush1.msra.mxu0 0.0
  %983 = vmatprep.subr.mxu0 0.0
  %984 = vmatpush1.msra.mxu0 0.0
  %985 = vmatprep.subr.mxu0 0.0
  %986 = vmatpush1.msra.mxu0 0.0
  %987 = vmatprep.subr.mxu0 0.0
  %988 = vmatpush1.msra.mxu0 0.0
  %989 = vmatprep.subr.mxu0 0.0
  %990 = vmatpush1.msra.mxu0 0.0
  %991 = vmatprep.subr.mxu0 0.0
  %992 = vmatpush1.msra.mxu0 0.0
  %993 = vmatprep.subr.mxu0 0.0
  %994 = vmatpush1.msra.mxu0 0.0
  %995 = vmatprep.subr.mxu0 0.0
  %996 = vmatpush1.msra.mxu0 0.0
  %997 = vmatprep.subr.mxu0 0.0
  %998 = vmatpush1.msra.mxu0 0.0
  %999 = vmatprep.subr.mxu0 0.0
  %1000 = vmatpush1.msra.mxu0 0.0
  %1001 = vmatprep.subr.mxu0 0.0
  %1002 = vmatpush1.msra.mxu0 0.0
  %1003 = vmatprep.subr.mxu0 0.0
  %1004 = vmatpush1.msra.mxu0 0.0
  %1005 = vmatprep.mubr.f32.mxu0 0.0
  %1006 = vmatmul.mubr.f32.gmra.mrb[0].mxu0 %v939
  %v1007 = vpop.f32.mrb[0].mxu0
  %v1008 = vadd.f32 %v136, %v1007
  %v1009 = vpop.f32.mrb[0].mxu0
  %1010 = vdwg.mxu0
  %1012 = vst.msk [vmem:[#allocation2 + $0x8] sm:$0x3] %vm367, %v938
  %v1014 = vrot.slane %v927, 6
  %v1016 = vadd.f32 %v55, %v1014
  %v1017 = vtanh.pop %v1016
  %v1019 = vrot.slane %v1017, 2
  %v1020 = vsel %vm59, %v1019, 0
  %1022 = vmatprep.subr.mxu0 0.0
  %1023 = vmatpush1.msra.mxu0 %v18
  %1024 = vmatprep.subr.mxu0 0.0
  %1025 = vmatpush1.msra.mxu0 %v19
  %1026 = vmatprep.subr.mxu0 0.0
  %1027 = vmatpush1.msra.mxu0 %v20
  %1028 = vmatprep.subr.mxu0 0.0
  %1029 = vmatpush1.msra.mxu0 %v21
  %1030 = vmatprep.subr.mxu0 0.0
  %1031 = vmatpush1.msra.mxu0 0.0
  %1032 = vmatprep.subr.mxu0 0.0
  %1033 = vmatpush1.msra.mxu0 0.0
  %1034 = vmatprep.subr.mxu0 0.0
  %1035 = vmatpush1.msra.mxu0 0.0
  %1036 = vmatprep.subr.mxu0 0.0
  %1037 = vmatpush1.msra.mxu0 0.0
  %1038 = vmatprep.subr.mxu0 0.0
  %1039 = vmatpush1.msra.mxu0 0.0
  %1040 = vmatprep.subr.mxu0 0.0
  %1041 = vmatpush1.msra.mxu0 0.0
  %1042 = vmatprep.subr.mxu0 0.0
  %1043 = vmatpush1.msra.mxu0 0.0
  %1044 = vmatprep.subr.mxu0 0.0
  %1045 = vmatpush1.msra.mxu0 0.0
  %1046 = vmatprep.subr.mxu0 0.0
  %1047 = vmatpush1.msra.mxu0 0.0
  %1048 = vmatprep.subr.mxu0 0.0
  %1049 = vmatpush1.msra.mxu0 0.0
  %1050 = vmatprep.subr.mxu0 0.0
  %1051 = vmatpush1.msra.mxu0 0.0
  %1052 = vmatprep.subr.mxu0 0.0
  %1053 = vmatpush1.msra.mxu0 0.0
  %1054 = vmatprep.subr.mxu0 0.0
  %1055 = vmatpush1.msra.mxu0 0.0
  %1056 = vmatprep.subr.mxu0 0.0
  %1057 = vmatpush1.msra.mxu0 0.0
  %1058 = vmatprep.subr.mxu0 0.0
  %1059 = vmatpush1.msra.mxu0 0.0
  %1060 = vmatprep.subr.mxu0 0.0
  %1061 = vmatpush1.msra.mxu0 0.0
  %1062 = vmatprep.subr.mxu0 0.0
  %1063 = vmatpush1.msra.mxu0 0.0
  %1064 = vmatprep.subr.mxu0 0.0
  %1065 = vmatpush1.msra.mxu0 0.0
  %1066 = vmatprep.subr.mxu0 0.0
  %1067 = vmatpush1.msra.mxu0 0.0
  %1068 = vmatprep.subr.mxu0 0.0
  %1069 = vmatpush1.msra.mxu0 0.0
  %1070 = vmatprep.subr.mxu0 0.0
  %1071 = vmatpush1.msra.mxu0 0.0
  %1072 = vmatprep.subr.mxu0 0.0
  %1073 = vmatpush1.msra.mxu0 0.0
  %1074 = vmatprep.subr.mxu0 0.0
  %1075 = vmatpush1.msra.mxu0 0.0
  %1076 = vmatprep.subr.mxu0 0.0
  %1077 = vmatpush1.msra.mxu0 0.0
  %1078 = vmatprep.subr.mxu0 0.0
  %1079 = vmatpush1.msra.mxu0 0.0
  %1080 = vmatprep.subr.mxu0 0.0
  %1081 = vmatpush1.msra.mxu0 0.0
  %1082 = vmatprep.subr.mxu0 0.0
  %1083 = vmatpush1.msra.mxu0 0.0
  %1084 = vmatprep.subr.mxu0 0.0
  %1085 = vmatpush1.msra.mxu0 0.0
  %1086 = vmatprep.mubr.f32.mxu0 0.0
  %1087 = vmatmul.mubr.f32.gmra.mrb[0].mxu0 %v1020
  %v1088 = vpop.f32.mrb[0].mxu0
  %v1089 = vadd.f32 0.0, %v1088
  %v1090 = vpop.f32.mrb[0].mxu0
  %1091 = vdwg.mxu0
  %1093 = vrot.lane.b32.xlu0 %v1008, 32
  %v1094 = vpop.permute.xlu0 %1093
  %v1096 = vadd.f32 %v1089, %v1094
  %v1097 = vtanh.pop %v1096
  %1099 = vrot.lane.b32.xlu0 %v1097, 96
  %v1100 = vpop.permute.xlu0 %1099
  %v1101 = vsel %vm59, %v1100, 0
  %1103 = vmatprep.subr.mxu0 0.0
  %1104 = vmatpush1.msra.mxu0 %v23
  %1105 = vmatprep.subr.mxu0 0.0
  %1106 = vmatpush1.msra.mxu0 %v24
  %1107 = vmatprep.subr.mxu0 0.0
  %1108 = vmatpush1.msra.mxu0 %v25
  %1109 = vmatprep.subr.mxu0 0.0
  %1110 = vmatpush1.msra.mxu0 %v26
  %1111 = vmatprep.subr.mxu0 0.0
  %1112 = vmatpush1.msra.mxu0 0.0
  %1113 = vmatprep.subr.mxu0 0.0
  %1114 = vmatpush1.msra.mxu0 0.0
  %1115 = vmatprep.subr.mxu0 0.0
  %1116 = vmatpush1.msra.mxu0 0.0
  %1117 = vmatprep.subr.mxu0 0.0
  %1118 = vmatpush1.msra.mxu0 0.0
  %1119 = vmatprep.subr.mxu0 0.0
  %1120 = vmatpush1.msra.mxu0 0.0
  %1121 = vmatprep.subr.mxu0 0.0
  %1122 = vmatpush1.msra.mxu0 0.0
  %1123 = vmatprep.subr.mxu0 0.0
  %1124 = vmatpush1.msra.mxu0 0.0
  %1125 = vmatprep.subr.mxu0 0.0
  %1126 = vmatpush1.msra.mxu0 0.0
  %1127 = vmatprep.subr.mxu0 0.0
  %1128 = vmatpush1.msra.mxu0 0.0
  %1129 = vmatprep.subr.mxu0 0.0
  %1130 = vmatpush1.msra.mxu0 0.0
  %1131 = vmatprep.subr.mxu0 0.0
  %1132 = vmatpush1.msra.mxu0 0.0
  %1133 = vmatprep.subr.mxu0 0.0
  %1134 = vmatpush1.msra.mxu0 0.0
  %1135 = vmatprep.subr.mxu0 0.0
  %1136 = vmatpush1.msra.mxu0 0.0
  %1137 = vmatprep.subr.mxu0 0.0
  %1138 = vmatpush1.msra.mxu0 0.0
  %1139 = vmatprep.subr.mxu0 0.0
  %1140 = vmatpush1.msra.mxu0 0.0
  %1141 = vmatprep.subr.mxu0 0.0
  %1142 = vmatpush1.msra.mxu0 0.0
  %1143 = vmatprep.subr.mxu0 0.0
  %1144 = vmatpush1.msra.mxu0 0.0
  %1145 = vmatprep.subr.mxu0 0.0
  %1146 = vmatpush1.msra.mxu0 0.0
  %1147 = vmatprep.subr.mxu0 0.0
  %1148 = vmatpush1.msra.mxu0 0.0
  %1149 = vmatprep.subr.mxu0 0.0
  %1150 = vmatpush1.msra.mxu0 0.0
  %1151 = vmatprep.subr.mxu0 0.0
  %1152 = vmatpush1.msra.mxu0 0.0
  %1153 = vmatprep.subr.mxu0 0.0
  %1154 = vmatpush1.msra.mxu0 0.0
  %1155 = vmatprep.subr.mxu0 0.0
  %1156 = vmatpush1.msra.mxu0 0.0
  %1157 = vmatprep.subr.mxu0 0.0
  %1158 = vmatpush1.msra.mxu0 0.0
  %1159 = vmatprep.subr.mxu0 0.0
  %1160 = vmatpush1.msra.mxu0 0.0
  %1161 = vmatprep.subr.mxu0 0.0
  %1162 = vmatpush1.msra.mxu0 0.0
  %1163 = vmatprep.subr.mxu0 0.0
  %1164 = vmatpush1.msra.mxu0 0.0
  %1165 = vmatprep.subr.mxu0 0.0
  %1166 = vmatpush1.msra.mxu0 0.0
  %1167 = vmatprep.mubr.f32.mxu0 0.0
  %1168 = vmatmul.mubr.f32.gmra.mrb[0].mxu0 %v1101
  %v1169 = vpop.f32.mrb[0].mxu0
  %v1170 = vadd.f32 %v136, %v1169
  %v1171 = vpop.f32.mrb[0].mxu0
  %1172 = vdwg.mxu0
  %1174 = vst.msk [vmem:[#allocation2 + $0xa] sm:$0x3] %vm367, %v1100
  %v1176 = vrot.slane %v1089, 4
  %v1178 = vadd.f32 %v55, %v1176
  %v1179 = vtanh.pop %v1178
  %v1181 = vrot.slane %v1179, 4
  %v1182 = vsel %vm59, %v1181, 0
  %1184 = vmatprep.subr.mxu0 0.0
  %1185 = vmatpush1.msra.mxu0 %v18
  %1186 = vmatprep.subr.mxu0 0.0
  %1187 = vmatpush1.msra.mxu0 %v19
  %1188 = vmatprep.subr.mxu0 0.0
  %1189 = vmatpush1.msra.mxu0 %v20
  %1190 = vmatprep.subr.mxu0 0.0
  %1191 = vmatpush1.msra.mxu0 %v21
  %1192 = vmatprep.subr.mxu0 0.0
  %1193 = vmatpush1.msra.mxu0 0.0
  %1194 = vmatprep.subr.mxu0 0.0
  %1195 = vmatpush1.msra.mxu0 0.0
  %1196 = vmatprep.subr.mxu0 0.0
  %1197 = vmatpush1.msra.mxu0 0.0
  %1198 = vmatprep.subr.mxu0 0.0
  %1199 = vmatpush1.msra.mxu0 0.0
  %1200 = vmatprep.subr.mxu0 0.0
  %1201 = vmatpush1.msra.mxu0 0.0
  %1202 = vmatprep.subr.mxu0 0.0
  %1203 = vmatpush1.msra.mxu0 0.0
  %1204 = vmatprep.subr.mxu0 0.0
  %1205 = vmatpush1.msra.mxu0 0.0
  %1206 = vmatprep.subr.mxu0 0.0
  %1207 = vmatpush1.msra.mxu0 0.0
  %1208 = vmatprep.subr.mxu0 0.0
  %1209 = vmatpush1.msra.mxu0 0.0
  %1210 = vmatprep.subr.mxu0 0.0
  %1211 = vmatpush1.msra.mxu0 0.0
  %1212 = vmatprep.subr.mxu0 0.0
  %1213 = vmatpush1.msra.mxu0 0.0
  %1214 = vmatprep.subr.mxu0 0.0
  %1215 = vmatpush1.msra.mxu0 0.0
  %1216 = vmatprep.subr.mxu0 0.0
  %1217 = vmatpush1.msra.mxu0 0.0
  %1218 = vmatprep.subr.mxu0 0.0
  %1219 = vmatpush1.msra.mxu0 0.0
  %1220 = vmatprep.subr.mxu0 0.0
  %1221 = vmatpush1.msra.mxu0 0.0
  %1222 = vmatprep.subr.mxu0 0.0
  %1223 = vmatpush1.msra.mxu0 0.0
  %1224 = vmatprep.subr.mxu0 0.0
  %1225 = vmatpush1.msra.mxu0 0.0
  %1226 = vmatprep.subr.mxu0 0.0
  %1227 = vmatpush1.msra.mxu0 0.0
  %1228 = vmatprep.subr.mxu0 0.0
  %1229 = vmatpush1.msra.mxu0 0.0
  %1230 = vmatprep.subr.mxu0 0.0
  %1231 = vmatpush1.msra.mxu0 0.0
  %1232 = vmatprep.subr.mxu0 0.0
  %1233 = vmatpush1.msra.mxu0 0.0
  %1234 = vmatprep.subr.mxu0 0.0
  %1235 = vmatpush1.msra.mxu0 0.0
  %1236 = vmatprep.subr.mxu0 0.0
  %1237 = vmatpush1.msra.mxu0 0.0
  %1238 = vmatprep.subr.mxu0 0.0
  %1239 = vmatpush1.msra.mxu0 0.0
  %1240 = vmatprep.subr.mxu0 0.0
  %1241 = vmatpush1.msra.mxu0 0.0
  %1242 = vmatprep.subr.mxu0 0.0
  %1243 = vmatpush1.msra.mxu0 0.0
  %1244 = vmatprep.subr.mxu0 0.0
  %1245 = vmatpush1.msra.mxu0 0.0
  %1246 = vmatprep.subr.mxu0 0.0
  %1247 = vmatpush1.msra.mxu0 0.0
  %1248 = vmatprep.mubr.f32.mxu0 0.0
  %1249 = vmatmul.mubr.f32.gmra.mrb[0].mxu0 %v1182
  %v1250 = vpop.f32.mrb[0].mxu0
  %v1251 = vadd.f32 0.0, %v1250
  %v1252 = vpop.f32.mrb[0].mxu0
  %1253 = vdwg.mxu0
  %1255 = vrot.lane.b32.xlu0 %v1170, 32
  %v1256 = vpop.permute.xlu0 %1255
  %v1258 = vadd.f32 %v1251, %v1256
  %v1259 = vtanh.pop %v1258
  %1261 = vrot.lane.b32.xlu0 %v1259, 96
  %v1262 = vpop.permute.xlu0 %1261
  %v1263 = vsel %vm59, %v1262, 0
  %1265 = vmatprep.subr.mxu0 0.0
  %1266 = vmatpush1.msra.mxu0 %v23
  %1267 = vmatprep.subr.mxu0 0.0
  %1268 = vmatpush1.msra.mxu0 %v24
  %1269 = vmatprep.subr.mxu0 0.0
  %1270 = vmatpush1.msra.mxu0 %v25
  %1271 = vmatprep.subr.mxu0 0.0
  %1272 = vmatpush1.msra.mxu0 %v26
  %1273 = vmatprep.subr.mxu0 0.0
  %1274 = vmatpush1.msra.mxu0 0.0
  %1275 = vmatprep.subr.mxu0 0.0
  %1276 = vmatpush1.msra.mxu0 0.0
  %1277 = vmatprep.subr.mxu0 0.0
  %1278 = vmatpush1.msra.mxu0 0.0
  %1279 = vmatprep.subr.mxu0 0.0
  %1280 = vmatpush1.msra.mxu0 0.0
  %1281 = vmatprep.subr.mxu0 0.0
  %1282 = vmatpush1.msra.mxu0 0.0
  %1283 = vmatprep.subr.mxu0 0.0
  %1284 = vmatpush1.msra.mxu0 0.0
  %1285 = vmatprep.subr.mxu0 0.0
  %1286 = vmatpush1.msra.mxu0 0.0
  %1287 = vmatprep.subr.mxu0 0.0
  %1288 = vmatpush1.msra.mxu0 0.0
  %1289 = vmatprep.subr.mxu0 0.0
  %1290 = vmatpush1.msra.mxu0 0.0
  %1291 = vmatprep.subr.mxu0 0.0
  %1292 = vmatpush1.msra.mxu0 0.0
  %1293 = vmatprep.subr.mxu0 0.0
  %1294 = vmatpush1.msra.mxu0 0.0
  %1295 = vmatprep.subr.mxu0 0.0
  %1296 = vmatpush1.msra.mxu0 0.0
  %1297 = vmatprep.subr.mxu0 0.0
  %1298 = vmatpush1.msra.mxu0 0.0
  %1299 = vmatprep.subr.mxu0 0.0
  %1300 = vmatpush1.msra.mxu0 0.0
  %1301 = vmatprep.subr.mxu0 0.0
  %1302 = vmatpush1.msra.mxu0 0.0
  %1303 = vmatprep.subr.mxu0 0.0
  %1304 = vmatpush1.msra.mxu0 0.0
  %1305 = vmatprep.subr.mxu0 0.0
  %1306 = vmatpush1.msra.mxu0 0.0
  %1307 = vmatprep.subr.mxu0 0.0
  %1308 = vmatpush1.msra.mxu0 0.0
  %1309 = vmatprep.subr.mxu0 0.0
  %1310 = vmatpush1.msra.mxu0 0.0
  %1311 = vmatprep.subr.mxu0 0.0
  %1312 = vmatpush1.msra.mxu0 0.0
  %1313 = vmatprep.subr.mxu0 0.0
  %1314 = vmatpush1.msra.mxu0 0.0
  %1315 = vmatprep.subr.mxu0 0.0
  %1316 = vmatpush1.msra.mxu0 0.0
  %1317 = vmatprep.subr.mxu0 0.0
  %1318 = vmatpush1.msra.mxu0 0.0
  %1319 = vmatprep.subr.mxu0 0.0
  %1320 = vmatpush1.msra.mxu0 0.0
  %1321 = vmatprep.subr.mxu0 0.0
  %1322 = vmatpush1.msra.mxu0 0.0
  %1323 = vmatprep.subr.mxu0 0.0
  %1324 = vmatpush1.msra.mxu0 0.0
  %1325 = vmatprep.subr.mxu0 0.0
  %1326 = vmatpush1.msra.mxu0 0.0
  %1327 = vmatprep.subr.mxu0 0.0
  %1328 = vmatpush1.msra.mxu0 0.0
  %1329 = vmatprep.mubr.f32.mxu0 0.0
  %1330 = vmatmul.mubr.f32.gmra.mrb[0].mxu0 %v1263
  %v1331 = vpop.f32.mrb[0].mxu0
  %v1332 = vadd.f32 %v136, %v1331
  %v1333 = vpop.f32.mrb[0].mxu0
  %1334 = vdwg.mxu0
  %1336 = vst.msk [vmem:[#allocation2 + $0xc] sm:$0x3] %vm367, %v1262
  %v1338 = vrot.slane %v1251, 2
  %v1340 = vadd.f32 %v55, %v1338
  %v1341 = vtanh.pop %v1340
  %v1343 = vrot.slane %v1341, 6
  %v1344 = vsel %vm59, %v1343, 0
  %1346 = vmatprep.subr.mxu0 0.0
  %1347 = vmatpush1.msra.mxu0 %v18
  %1348 = vmatprep.subr.mxu0 0.0
  %1349 = vmatpush1.msra.mxu0 %v19
  %1350 = vmatprep.subr.mxu0 0.0
  %1351 = vmatpush1.msra.mxu0 %v20
  %1352 = vmatprep.subr.mxu0 0.0
  %1353 = vmatpush1.msra.mxu0 %v21
  %1354 = vmatprep.subr.mxu0 0.0
  %1355 = vmatpush1.msra.mxu0 0.0
  %1356 = vmatprep.subr.mxu0 0.0
  %1357 = vmatpush1.msra.mxu0 0.0
  %1358 = vmatprep.subr.mxu0 0.0
  %1359 = vmatpush1.msra.mxu0 0.0
  %1360 = vmatprep.subr.mxu0 0.0
  %1361 = vmatpush1.msra.mxu0 0.0
  %1362 = vmatprep.subr.mxu0 0.0
  %1363 = vmatpush1.msra.mxu0 0.0
  %1364 = vmatprep.subr.mxu0 0.0
  %1365 = vmatpush1.msra.mxu0 0.0
  %1366 = vmatprep.subr.mxu0 0.0
  %1367 = vmatpush1.msra.mxu0 0.0
  %1368 = vmatprep.subr.mxu0 0.0
  %1369 = vmatpush1.msra.mxu0 0.0
  %1370 = vmatprep.subr.mxu0 0.0
  %1371 = vmatpush1.msra.mxu0 0.0
  %1372 = vmatprep.subr.mxu0 0.0
  %1373 = vmatpush1.msra.mxu0 0.0
  %1374 = vmatprep.subr.mxu0 0.0
  %1375 = vmatpush1.msra.mxu0 0.0
  %1376 = vmatprep.subr.mxu0 0.0
  %1377 = vmatpush1.msra.mxu0 0.0
  %1378 = vmatprep.subr.mxu0 0.0
  %1379 = vmatpush1.msra.mxu0 0.0
  %1380 = vmatprep.subr.mxu0 0.0
  %1381 = vmatpush1.msra.mxu0 0.0
  %1382 = vmatprep.subr.mxu0 0.0
  %1383 = vmatpush1.msra.mxu0 0.0
  %1384 = vmatprep.subr.mxu0 0.0
  %1385 = vmatpush1.msra.mxu0 0.0
  %1386 = vmatprep.subr.mxu0 0.0
  %1387 = vmatpush1.msra.mxu0 0.0
  %1388 = vmatprep.subr.mxu0 0.0
  %1389 = vmatpush1.msra.mxu0 0.0
  %1390 = vmatprep.subr.mxu0 0.0
  %1391 = vmatpush1.msra.mxu0 0.0
  %1392 = vmatprep.subr.mxu0 0.0
  %1393 = vmatpush1.msra.mxu0 0.0
  %1394 = vmatprep.subr.mxu0 0.0
  %1395 = vmatpush1.msra.mxu0 0.0
  %1396 = vmatprep.subr.mxu0 0.0
  %1397 = vmatpush1.msra.mxu0 0.0
  %1398 = vmatprep.subr.mxu0 0.0
  %1399 = vmatpush1.msra.mxu0 0.0
  %1400 = vmatprep.subr.mxu0 0.0
  %1401 = vmatpush1.msra.mxu0 0.0
  %1402 = vmatprep.subr.mxu0 0.0
  %1403 = vmatpush1.msra.mxu0 0.0
  %1404 = vmatprep.subr.mxu0 0.0
  %1405 = vmatpush1.msra.mxu0 0.0
  %1406 = vmatprep.subr.mxu0 0.0
  %1407 = vmatpush1.msra.mxu0 0.0
  %1408 = vmatprep.subr.mxu0 0.0
  %1409 = vmatpush1.msra.mxu0 0.0
  %1410 = vmatprep.mubr.f32.mxu0 0.0
  %1411 = vmatmul.mubr.f32.gmra.mrb[0].mxu0 %v1344
  %v1412 = vpop.f32.mrb[0].mxu0
  %v1413 = vadd.f32 0.0, %v1412
  %v1414 = vpop.f32.mrb[0].mxu0
  %1415 = vdwg.mxu0
  %1417 = vrot.lane.b32.xlu0 %v1332, 32
  %v1418 = vpop.permute.xlu0 %1417
  %v1420 = vadd.f32 %v1413, %v1418
  %v1421 = vtanh.pop %v1420
  %1423 = vrot.lane.b32.xlu0 %v1421, 96
  %v1424 = vpop.permute.xlu0 %1423
  %1426 = vst.msk [vmem:[#allocation2 + $0xe] sm:$0x3] %vm367, %v1424
  %vm1427 = vcmask 261126
  %1428 = vst.msk [vmem:[%s4 - $0x6] sm:$0xc0] %vm1427, %v1341
  %s1429 = scalar_lea.vmem %s4, 2
  %1430 = vst.msk [vmem:[%s1429] sm:$0x3] %vm367, %v1424
  %v1431 = vld [vmem:[#allocation2] sm:$0xff]
  %v1432 = vld [vmem:[#allocation2 + $0x8] sm:$0xff]
  %v1433 = vlaneseq
  %v1434 = vshrl.u32 %v1433, 7
  %v1435 = vsub.s32 0, %v1434
  %v1436 = vrot.slane %v31, %v1435
  %v1438 = vsel %vm59, %v1431, 0
  %v1441 = vsel %vm59, %v1432, 0
  %1443 = vmatprep.subr.mxu0 0.0
  %1444 = vmatpush1.msra.mxu0 %v27
  %1445 = vmatprep.subr.mxu0 0.0
  %1446 = vmatpush1.msra.mxu0 %v28
  %1447 = vmatprep.subr.mxu0 0.0
  %1448 = vmatpush1.msra.mxu0 %v29
  %1449 = vmatprep.subr.mxu0 0.0
  %1450 = vmatpush1.msra.mxu0 %v30
  %1451 = vmatprep.subr.mxu0 0.0
  %1452 = vmatpush1.msra.mxu0 0.0
  %1453 = vmatprep.subr.mxu0 0.0
  %1454 = vmatpush1.msra.mxu0 0.0
  %1455 = vmatprep.subr.mxu0 0.0
  %1456 = vmatpush1.msra.mxu0 0.0
  %1457 = vmatprep.subr.mxu0 0.0
  %1458 = vmatpush1.msra.mxu0 0.0
  %1459 = vmatprep.subr.mxu0 0.0
  %1460 = vmatpush1.msra.mxu0 0.0
  %1461 = vmatprep.subr.mxu0 0.0
  %1462 = vmatpush1.msra.mxu0 0.0
  %1463 = vmatprep.subr.mxu0 0.0
  %1464 = vmatpush1.msra.mxu0 0.0
  %1465 = vmatprep.subr.mxu0 0.0
  %1466 = vmatpush1.msra.mxu0 0.0
  %1467 = vmatprep.subr.mxu0 0.0
  %1468 = vmatpush1.msra.mxu0 0.0
  %1469 = vmatprep.subr.mxu0 0.0
  %1470 = vmatpush1.msra.mxu0 0.0
  %1471 = vmatprep.subr.mxu0 0.0
  %1472 = vmatpush1.msra.mxu0 0.0
  %1473 = vmatprep.subr.mxu0 0.0
  %1474 = vmatpush1.msra.mxu0 0.0
  %1475 = vmatprep.subr.mxu0 0.0
  %1476 = vmatpush1.msra.mxu0 0.0
  %1477 = vmatprep.subr.mxu0 0.0
  %1478 = vmatpush1.msra.mxu0 0.0
  %1479 = vmatprep.subr.mxu0 0.0
  %1480 = vmatpush1.msra.mxu0 0.0
  %1481 = vmatprep.subr.mxu0 0.0
  %1482 = vmatpush1.msra.mxu0 0.0
  %1483 = vmatprep.subr.mxu0 0.0
  %1484 = vmatpush1.msra.mxu0 0.0
  %1485 = vmatprep.subr.mxu0 0.0
  %1486 = vmatpush1.msra.mxu0 0.0
  %1487 = vmatprep.subr.mxu0 0.0
  %1488 = vmatpush1.msra.mxu0 0.0
  %1489 = vmatprep.subr.mxu0 0.0
  %1490 = vmatpush1.msra.mxu0 0.0
  %1491 = vmatprep.subr.mxu0 0.0
  %1492 = vmatpush1.msra.mxu0 0.0
  %1493 = vmatprep.subr.mxu0 0.0
  %1494 = vmatpush1.msra.mxu0 0.0
  %1495 = vmatprep.subr.mxu0 0.0
  %1496 = vmatpush1.msra.mxu0 0.0
  %1497 = vmatprep.subr.mxu0 0.0
  %1498 = vmatpush1.msra.mxu0 0.0
  %1499 = vmatprep.subr.mxu0 0.0
  %1500 = vmatpush1.msra.mxu0 0.0
  %1501 = vmatprep.subr.mxu0 0.0
  %1502 = vmatpush1.msra.mxu0 0.0
  %1503 = vmatprep.subr.mxu0 0.0
  %1504 = vmatpush1.msra.mxu0 0.0
  %1505 = vmatprep.subr.mxu0 0.0
  %1506 = vmatpush1.msra.mxu0 0.0
  %1507 = vmatprep.mubr.f32.mxu0 0.0
  %1508 = vmatmul.mubr.f32.gmra.mrb[0].mxu0 %v1438
  %v1509 = vpop.f32.mrb[0].mxu0
  %v1510 = vadd.f32 %v1436, %v1509
  %v1511 = vpop.f32.mrb[0].mxu0
  %1512 = vmatprep.mubr.f32.mxu0 0.0
  %1513 = vmatmul.mubr.f32.gmra.mrb[0].mxu0 %v1441
  %v1514 = vpop.f32.mrb[0].mxu0
  %v1515 = vadd.f32 %v1436, %v1514
  %v1516 = vpop.f32.mrb[0].mxu0
  %1517 = vdwg.mxu0
  %1518 = vst [vmem:[%s3] sm:$0xff] %v1510
  %1519 = vst [vmem:[%s3 + $0x8] sm:$0xff] %v1515
  // Predicated region
  $region14: #{rnn_forward.1} parent=0 // pred_check
    _
  $region15: #{rnn_forward.1} parent=0 // pred_check_branch
    %1521 = sbr.rel (0) target = $region17
  $region16: #{rnn_forward.1} parent=0 // pred_region
    _
  $region17: #{rnn_forward.1} parent=0 // pred_fallthru
    _
  // Predicated region
  $region18: #{rnn_forward.1} parent=0 // pred_check
    _
  $region19: #{rnn_forward.1} parent=0 // pred_check_branch
    %1523 = sbr.rel (0) target = $region21
  $region20: #{rnn_forward.1} parent=0 // pred_region
    _
  $region21: #{rnn_forward.1} parent=0 // pred_fallthru
    _
  // Predicated region
  $region22: #{rnn_forward.1} parent=0 // pred_check
    _
  $region23: #{rnn_forward.1} parent=0 // pred_check_branch
    %1525 = sbr.rel (0) target = $region25
  $region24: #{rnn_forward.1} parent=0 // pred_region
    _
  $region25: #{rnn_forward.1} parent=0 // pred_fallthru
    _
  // Predicated region
  $region26: #{rnn_forward.1} parent=0 // pred_check
    _
  $region27: #{rnn_forward.1} parent=0 // pred_check_branch
    %1527 = sbr.rel (0) target = $region29
  $region28: #{rnn_forward.1} parent=0 // pred_region
    _
  $region29: #{rnn_forward.1} parent=0 // pred_fallthru
    _

</llo_original>
